<compile_context>
chip_gen: v7x
topology: tpu7x:2x2x1
jax: 0.10.0
libtpu: 0.0.40
codegen_flags: <defaults>
</compile_context>

<pallas_src>
import functools

import jax
import jax.numpy as jnp
import numpy as np
from jax.experimental import pallas as pl
from jax.experimental.pallas import tpu as pltpu

PARAM = {
    "drop_proba": [0.1, 0.1, 0.1, 0.1],  # identity at inference
    "hidden": 32,
    "activation": "relu",
    "pool": "max",
}


# ----------------------------------------------------------------------------
# Pallas kernels
# ----------------------------------------------------------------------------
def _conv_pool_act_kernel(p_ref, w_ref, b_ref, o_ref, *, rows, pool, act):
    """p:(4R, K) w:(K, C) b:(1, C) -> o:(R, C) = act(pool2x2(p @ w + b)).

    The four pooling-window offsets (dh, dw) are four contiguous row blocks of
    the patch matrix, so pooling is an elementwise max/avg of aligned slabs.
    """
    conv = jnp.dot(p_ref[...], w_ref[...],
                   preferred_element_type=jnp.float32) + b_ref[...]
    R = rows
    c0 = conv[0 * R:1 * R, :]
    c1 = conv[1 * R:2 * R, :]
    c2 = conv[2 * R:3 * R, :]
    c3 = conv[3 * R:4 * R, :]
    if pool == "max":
        p = jnp.maximum(jnp.maximum(c0, c1), jnp.maximum(c2, c3))
    else:  # avg
        p = (c0 + c1 + c2 + c3) * 0.25
    o_ref[...] = jnp.maximum(p, 0.0) if act == "relu" else jnp.tanh(p)


def _conv2_fc_head_kernel(p2_ref, w2_ref, b2_ref, wf1_ref, bf1_ref, wf2_ref,
                          bf2_ref, w3x_ref, w3y_ref, b3_ref, w4_ref, b4_ref,
                          w5_ref, b5_ref, out10_ref, z_ref,
                          *, batch, pool, act):
    """conv2 + pool + act + fc1 + act + fc2 + (fc3,relu,fc4,relu,fc5) head."""
    B = batch                 # = 2N: x-branch rows then y-branch rows
    R = 4 * B                 # pooled conv2 rows, ordered (ph, pw, b)

    def activate(v):
        return jnp.maximum(v, 0.0) if act == "relu" else jnp.tanh(v)

    # conv2 (im2col matmul) + bias + fused 2x2 pool + activation.
    conv = jnp.dot(p2_ref[...], w2_ref[...],
                   preferred_element_type=jnp.float32) + b2_ref[...]
    c0 = conv[0 * R:1 * R, :]
    c1 = conv[1 * R:2 * R, :]
    c2 = conv[2 * R:3 * R, :]
    c3 = conv[3 * R:4 * R, :]
    if pool == "max":
        pooled = jnp.maximum(jnp.maximum(c0, c1), jnp.maximum(c2, c3))
    else:
        pooled = (c0 + c1 + c2 + c3) * 0.25
    p2a = activate(pooled)                   # (4B, 64), rows (ph, pw, b)

    # fc1: per-sample flatten == sum over the 4 spatial positions of
    # (B, 64) @ (64, hidden) blocks (fc1 weight rows pre-permuted to (h,w,c)).
    h1 = bf1_ref[...]
    for k in range(4):
        h1 = h1 + jnp.dot(p2a[k * B:(k + 1) * B, :],
                          wf1_ref[k * 64:(k + 1) * 64, :],
                          preferred_element_type=jnp.float32)
    h1 = activate(h1)
    out10 = jnp.dot(h1, wf2_ref[...],
                    preferred_element_type=jnp.float32) + bf2_ref[...]
    out10_ref[...] = out10                   # (2N, 10): x rows then y rows

    # head: z = fc5(relu(fc4(relu(fc3(cat[x, y])))))  (head is hard-coded relu)
    # fc3 is pre-split so the concat becomes a sum of two matmuls.
    N = B // 2
    x10 = out10[0:N, :]
    y10 = out10[N:2 * N, :]
    z1 = jnp.maximum(
        jnp.dot(x10, w3x_ref[...], preferred_element_type=jnp.float32)
        + jnp.dot(y10, w3y_ref[...], preferred_element_type=jnp.float32)
        + b3_ref[...], 0.0)
    z2 = jnp.maximum(
        jnp.dot(z1, w4_ref[...], preferred_element_type=jnp.float32)
        + b4_ref[...], 0.0)
    z_ref[...] = (jnp.dot(z2, w5_ref[...], preferred_element_type=jnp.float32)
                  + b5_ref[...])


# ----------------------------------------------------------------------------
# pallas_call wrappers (grid-less single block: whole working set < 1 MiB, so
# full-VMEM blocks; for large N, add a row grid + dimension_semantics
# ("parallel",) to shard across v7x's two TensorCores).
# ----------------------------------------------------------------------------
def conv_pool_act(patches, w, b, rows, pool, act):
    kern = functools.partial(_conv_pool_act_kernel, rows=rows, pool=pool,
                             act=act)
    return pl.pallas_call(
        kern,
        out_shape=jax.ShapeDtypeStruct((rows, w.shape[1]), jnp.float32),
        in_specs=[pl.BlockSpec(memory_space=pltpu.MemorySpace.VMEM)] * 3,
        out_specs=pl.BlockSpec(memory_space=pltpu.MemorySpace.VMEM),
    )(patches, w, b)


def conv2_fc_head(P2, q, B, pool, act):
    kern = functools.partial(_conv2_fc_head_kernel, batch=B, pool=pool,
                             act=act)
    return pl.pallas_call(
        kern,
        out_shape=(jax.ShapeDtypeStruct((B, 10), jnp.float32),
                   jax.ShapeDtypeStruct((B // 2, 2), jnp.float32)),
        in_specs=[pl.BlockSpec(memory_space=pltpu.MemorySpace.VMEM)] * 14,
        out_specs=(pl.BlockSpec(memory_space=pltpu.MemorySpace.VMEM),
                   pl.BlockSpec(memory_space=pltpu.MemorySpace.VMEM)),
    )(P2, q["w2"], q["b2"], q["wf1"], q["bf1"], q["wf2"], q["bf2"],
      q["w3x"], q["w3y"], q["b3"], q["w4"], q["b4"], q["w5"], q["b5"])


# ----------------------------------------------------------------------------
# JAX glue
# ----------------------------------------------------------------------------
def pooled_conv_patches(x_hwbc):
    """x: (H, W, B, C) -> patches (4 * PH*PW*B, 9*C) for a fused
    (3x3 valid conv) -> (2x2 stride-2 pool) block.

    Row order: (dh, dw, ph, pw, b) -- the four (dh, dw) pool-window offsets are
    four contiguous row blocks.  Column order: (kh, kw, cin) -- matches the
    prepared conv weights.
    """
    H, W, B, C = x_hwbc.shape
    PH, PW = (H - 2) // 2, (W - 2) // 2
    blocks = []
    for dh in (0, 1):
        for dw in (0, 1):
            taps = []
            for kh in range(3):
                for kw in range(3):
                    s = x_hwbc[dh + kh: dh + kh + 2 * PH - 1: 2,
                               dw + kw: dw + kw + 2 * PW - 1: 2]
                    taps.append(s.reshape(PH * PW * B, C))
            blocks.append(jnp.concatenate(taps, axis=1))
    return jnp.concatenate(blocks, axis=0)


def init_params(key, hidden):
    """PyTorch-layout parameters (same init scheme as nn.Conv2d/nn.Linear)."""
    def u(key, shape, fan_in):
        bound = 1.0 / jnp.sqrt(jnp.float32(fan_in))
        return jax.random.uniform(key, shape, jnp.float32, -bound, bound)

    ks = jax.random.split(key, 16)
    p = {}
    p["conv1_w"] = u(ks[0], (32, 1, 3, 3), 1 * 9)
    p["conv1_b"] = u(ks[1], (32,), 1 * 9)
    p["conv2_w"] = u(ks[2], (64, 32, 3, 3), 32 * 9)
    p["conv2_b"] = u(ks[3], (64,), 32 * 9)
    p["fc1_w"] = u(ks[4], (hidden, 256), 256)
    p["fc1_b"] = u(ks[5], (hidden,), 256)
    p["fc2_w"] = u(ks[6], (10, hidden), hidden)
    p["fc2_b"] = u(ks[7], (10,), hidden)
    p["fc3_w"] = u(ks[8], (60, 20), 20)
    p["fc3_b"] = u(ks[9], (60,), 20)
    p["fc4_w"] = u(ks[10], (90, 60), 60)
    p["fc4_b"] = u(ks[11], (90,), 60)
    p["fc5_w"] = u(ks[12], (2, 90), 90)
    p["fc5_b"] = u(ks[13], (2,), 90)
    # fcnaive (2,2) exists in __init__ but is unused in forward.
    p["fcnaive_w"] = u(ks[14], (2, 2), 2)
    p["fcnaive_b"] = u(ks[15], (2,), 2)
    return p


def prepare_params(p):
    """One-time re-layout of the PyTorch-style weights for the fused kernels."""
    hidden = p["fc1_w"].shape[0]
    q = {}
    # conv1 (32,1,3,3) -> (9, 32), rows ordered (kh, kw).
    q["w1"] = p["conv1_w"].reshape(32, 9).T
    q["b1"] = p["conv1_b"].reshape(1, 32)
    # conv2 (64,32,3,3) -> (288, 64), rows ordered (kh, kw, cin).
    q["w2"] = p["conv2_w"].transpose(2, 3, 1, 0).reshape(9 * 32, 64)
    q["b2"] = p["conv2_b"].reshape(1, 64)
    # fc1 (hidden,256 [c,h,w]) -> (256 [h,w,c], hidden) to match the kernel's
    # channel-last flatten.
    q["wf1"] = (p["fc1_w"].reshape(hidden, 64, 2, 2)
                .transpose(2, 3, 1, 0).reshape(256, hidden))
    q["bf1"] = p["fc1_b"].reshape(1, hidden)
    q["wf2"] = p["fc2_w"].T                 # (hidden, 10)
    q["bf2"] = p["fc2_b"].reshape(1, 10)
    # fc3 split so cat([x, y]) @ W.T == x @ w3x + y @ w3y.
    q["w3x"] = p["fc3_w"][:, :10].T         # (10, 60)
    q["w3y"] = p["fc3_w"][:, 10:].T         # (10, 60)
    q["b3"] = p["fc3_b"].reshape(1, 60)
    q["w4"] = p["fc4_w"].T                  # (60, 90)
    q["b4"] = p["fc4_b"].reshape(1, 90)
    q["w5"] = p["fc5_w"].T                  # (90, 2)
    q["b5"] = p["fc5_b"].reshape(1, 2)
    return q


def compnet2_forward(q, input_, act, pool):
    """input_: (N, 2, 14, 14) f32 -> (x, y, z) = ((N,10), (N,10), (N,2))."""
    N = input_.shape[0]
    B = 2 * N
    # Batch the two weight-sharing branches into one pass:
    # rows [x_0 .. x_{N-1}, y_0 .. y_{N-1}].
    img = jnp.concatenate([input_[:, 0, :, :], input_[:, 1, :, :]], axis=0)
    img_hwbc = jnp.transpose(img, (1, 2, 0))[..., None]        # (14, 14, B, 1)

    # conv1 (1->32, k=3) + 2x2 pool + act, fused in one kernel.
    P1 = pooled_conv_patches(img_hwbc)                         # (4*36B, 9)
    p1 = conv_pool_act(P1, q["w1"], q["b1"], 36 * B, pool, act)  # (36B, 32)
    p1_hwbc = p1.reshape(6, 6, B, 32)                          # rows were (ph,pw,b)

    # conv2 + pool + act + fc1 + act + fc2 + fc3/fc4/fc5 head, one kernel.
    P2 = pooled_conv_patches(p1_hwbc)                          # (16B, 288)
    out10, z = conv2_fc_head(P2, q, B, pool, act)
    return out10[:N], out10[N:], z


# ----------------------------------------------------------------------------
# Pure-JAX reference (for correctness check only).
# ----------------------------------------------------------------------------
def reference_forward(p, input_, act, pool):
    def conv2d(x, w, b):  # x:(N,Cin,H,W)  w:(Cout,Cin,kh,kw)
        y = jax.lax.conv_general_dilated(
            x, w, window_strides=(1, 1), padding="VALID",
            dimension_numbers=("NCHW", "OIHW", "NCHW"))
        return y + b[None, :, None, None]

    def pool2(x):
        if pool == "max":
            return jax.lax.reduce_window(x, -jnp.inf, jax.lax.max,
                                         (1, 1, 2, 2), (1, 1, 2, 2), "VALID")
        return jax.lax.reduce_window(x, 0.0, jax.lax.add,
                                     (1, 1, 2, 2), (1, 1, 2, 2), "VALID") * 0.25

    def activate(v):
        return jnp.maximum(v, 0.0) if act == "relu" else jnp.tanh(v)

    def branch(img):  # (N, 1, 14, 14)
        h = activate(pool2(conv2d(img, p["conv1_w"], p["conv1_b"])))
        h = activate(pool2(conv2d(h, p["conv2_w"], p["conv2_b"])))
        h = activate(h.reshape(h.shape[0], -1) @ p["fc1_w"].T + p["fc1_b"])
        return h @ p["fc2_w"].T + p["fc2_b"]

    x = branch(input_[:, 0:1])
    y = branch(input_[:, 1:2])
    z = jnp.concatenate([x, y], axis=1)
    z = jnp.maximum(z @ p["fc3_w"].T + p["fc3_b"], 0.0)
    z = jnp.maximum(z @ p["fc4_w"].T + p["fc4_b"], 0.0)
    z = z @ p["fc5_w"].T + p["fc5_b"]
    return x, y, z


# ----------------------------------------------------------------------------
if __name__ == "__main__":
    if PARAM["activation"] not in ("relu", "tanh"):
        raise ValueError("Activation must be 'relu' or 'tanh'")
    if PARAM["pool"] not in ("max", "avg"):
        raise ValueError("Pool must be 'avg' or 'max'")

    key = jax.random.PRNGKey(0)
    k_in, k_par = jax.random.split(key)

    input_ = jax.random.normal(k_in, (2, 2, 14, 14), dtype=jnp.float32)
    params = init_params(k_par, PARAM["hidden"])
    prep = prepare_params(params)              # one-time weight re-layout

    fwd = jax.jit(functools.partial(
        compnet2_forward, act=PARAM["activation"], pool=PARAM["pool"]))
    x, y, z = fwd(prep, input_)
    jax.block_until_ready((x, y, z))

    assert x.shape == (2, 10) and y.shape == (2, 10) and z.shape == (2, 2)

    # Correctness check vs. pure-JAX reference (loose tol: MXU matmul passes).
    xr, yr, zr = reference_forward(params, input_, PARAM["activation"],
                                   PARAM["pool"])
    for got, want in zip((x, y, z), (xr, yr, zr)):
        np.testing.assert_allclose(np.asarray(got), np.asarray(want),
                                   rtol=5e-2, atol=5e-2)
    print("KERNEL_OK")
</pallas_src>

<mosaic_0001>
module attributes {stable_mosaic.version = 11 : i64} {
  func.func @_conv_pool_act_kernel(%arg0: memref<576x9xf32, #tpu.memory_space<vmem>>, %arg1: memref<9x32xf32, #tpu.memory_space<vmem>>, %arg2: memref<1x32xf32, #tpu.memory_space<vmem>>, %arg3: memref<144x32xf32, #tpu.memory_space<vmem>>) attributes {dimension_semantics = [], scalar_prefetch = 0 : i64, scratch_operands = 0 : i64, tpu.core_type = #tpu.core_type<tc>} {
    %c0 = arith.constant 0 : index
    %c0_0 = arith.constant 0 : index
    %0 = vector.load %arg0[%c0, %c0_0] : memref<576x9xf32, #tpu.memory_space<vmem>>, vector<576x9xf32>
    %c0_1 = arith.constant 0 : index
    %c0_2 = arith.constant 0 : index
    %1 = vector.load %arg1[%c0_1, %c0_2] : memref<9x32xf32, #tpu.memory_space<vmem>>, vector<9x32xf32>
    %cst = arith.constant dense<0.000000e+00> : vector<576x32xf32>
    %2 = tpu.matmul %0, %1, %cst {dimension_numbers = #tpu.dot_dimension_numbers<[1], [0], [0], [1], [0, 0, 1, 1], [], []>} : vector<576x9xf32>, vector<9x32xf32>, vector<576x32xf32> -> vector<576x32xf32>
    %c0_3 = arith.constant 0 : index
    %c0_4 = arith.constant 0 : index
    %3 = vector.load %arg2[%c0_3, %c0_4] : memref<1x32xf32, #tpu.memory_space<vmem>>, vector<1x32xf32>
    %4 = vector.broadcast %3 : vector<1x32xf32> to vector<576x32xf32>
    %5 = arith.addf %2, %4 : vector<576x32xf32>
    %6 = vector.extract_strided_slice %5 {offsets = [0, 0], sizes = [144, 32], strides = [1, 1]} : vector<576x32xf32> to vector<144x32xf32>
    %7 = vector.extract_strided_slice %5 {offsets = [144, 0], sizes = [144, 32], strides = [1, 1]} : vector<576x32xf32> to vector<144x32xf32>
    %8 = vector.extract_strided_slice %5 {offsets = [288, 0], sizes = [144, 32], strides = [1, 1]} : vector<576x32xf32> to vector<144x32xf32>
    %9 = vector.extract_strided_slice %5 {offsets = [432, 0], sizes = [144, 32], strides = [1, 1]} : vector<576x32xf32> to vector<144x32xf32>
    %10 = arith.maximumf %6, %7 : vector<144x32xf32>
    %11 = arith.maximumf %8, %9 : vector<144x32xf32>
    %12 = arith.maximumf %10, %11 : vector<144x32xf32>
    %cst_5 = arith.constant 0.000000e+00 : f32
    %13 = vector.broadcast %cst_5 : f32 to vector<144x32xf32>
    %14 = arith.maximumf %12, %13 : vector<144x32xf32>
    %c0_6 = arith.constant 0 : index
    %c0_7 = arith.constant 0 : index
    %15 = vector.load %arg3[%c0_6, %c0_7] : memref<144x32xf32, #tpu.memory_space<vmem>>, vector<144x32xf32>
    tpu.vector_store %arg3[%c0_6, %c0_7], %14 {strides = array<i32>} : memref<144x32xf32, #tpu.memory_space<vmem>>, vector<144x32xf32>,
    return
  }
}

module attributes {stable_mosaic.version = 11 : i64} {
  func.func @_conv2_fc_head_kernel(%arg0: memref<64x288xf32, #tpu.memory_space<vmem>>, %arg1: memref<288x64xf32, #tpu.memory_space<vmem>>, %arg2: memref<1x64xf32, #tpu.memory_space<vmem>>, %arg3: memref<256x32xf32, #tpu.memory_space<vmem>>, %arg4: memref<1x32xf32, #tpu.memory_space<vmem>>, %arg5: memref<32x10xf32, #tpu.memory_space<vmem>>, %arg6: memref<1x10xf32, #tpu.memory_space<vmem>>, %arg7: memref<10x60xf32, #tpu.memory_space<vmem>>, %arg8: memref<10x60xf32, #tpu.memory_space<vmem>>, %arg9: memref<1x60xf32, #tpu.memory_space<vmem>>, %arg10: memref<60x90xf32, #tpu.memory_space<vmem>>, %arg11: memref<1x90xf32, #tpu.memory_space<vmem>>, %arg12: memref<90x2xf32, #tpu.memory_space<vmem>>, %arg13: memref<1x2xf32, #tpu.memory_space<vmem>>, %arg14: memref<4x10xf32, #tpu.memory_space<vmem>>, %arg15: memref<2x2xf32, #tpu.memory_space<vmem>>) attributes {dimension_semantics = [], scalar_prefetch = 0 : i64, scratch_operands = 0 : i64, tpu.core_type = #tpu.core_type<tc>} {
    %c0 = arith.constant 0 : index
    %c0_0 = arith.constant 0 : index
    %0 = vector.load %arg0[%c0, %c0_0] : memref<64x288xf32, #tpu.memory_space<vmem>>, vector<64x288xf32>
    %c0_1 = arith.constant 0 : index
    %c0_2 = arith.constant 0 : index
    %1 = vector.load %arg1[%c0_1, %c0_2] : memref<288x64xf32, #tpu.memory_space<vmem>>, vector<288x64xf32>
    %cst = arith.constant dense<0.000000e+00> : vector<64x64xf32>
    %2 = tpu.matmul %0, %1, %cst {dimension_numbers = #tpu.dot_dimension_numbers<[1], [0], [0], [1], [0, 0, 1, 1], [], []>} : vector<64x288xf32>, vector<288x64xf32>, vector<64x64xf32> -> vector<64x64xf32>
    %c0_3 = arith.constant 0 : index
    %c0_4 = arith.constant 0 : index
    %3 = vector.load %arg2[%c0_3, %c0_4] : memref<1x64xf32, #tpu.memory_space<vmem>>, vector<1x64xf32>
    %4 = vector.broadcast %3 : vector<1x64xf32> to vector<64x64xf32>
    %5 = arith.addf %2, %4 : vector<64x64xf32>
    %6 = vector.extract_strided_slice %5 {offsets = [0, 0], sizes = [16, 64], strides = [1, 1]} : vector<64x64xf32> to vector<16x64xf32>
    %7 = vector.extract_strided_slice %5 {offsets = [16, 0], sizes = [16, 64], strides = [1, 1]} : vector<64x64xf32> to vector<16x64xf32>
    %8 = vector.extract_strided_slice %5 {offsets = [32, 0], sizes = [16, 64], strides = [1, 1]} : vector<64x64xf32> to vector<16x64xf32>
    %9 = vector.extract_strided_slice %5 {offsets = [48, 0], sizes = [16, 64], strides = [1, 1]} : vector<64x64xf32> to vector<16x64xf32>
    %10 = arith.maximumf %6, %7 : vector<16x64xf32>
    %11 = arith.maximumf %8, %9 : vector<16x64xf32>
    %12 = arith.maximumf %10, %11 : vector<16x64xf32>
    %cst_5 = arith.constant 0.000000e+00 : f32
    %13 = vector.broadcast %cst_5 : f32 to vector<16x64xf32>
    %14 = arith.maximumf %12, %13 : vector<16x64xf32>
    %c0_6 = arith.constant 0 : index
    %c0_7 = arith.constant 0 : index
    %15 = vector.load %arg4[%c0_6, %c0_7] : memref<1x32xf32, #tpu.memory_space<vmem>>, vector<1x32xf32>
    %16 = vector.extract_strided_slice %14 {offsets = [0, 0], sizes = [4, 64], strides = [1, 1]} : vector<16x64xf32> to vector<4x64xf32>
    %c0_8 = arith.constant 0 : index
    %c0_9 = arith.constant 0 : index
    %17 = vector.load %arg3[%c0_8, %c0_9] : memref<256x32xf32, #tpu.memory_space<vmem>>, vector<64x32xf32>
    %cst_10 = arith.constant dense<0.000000e+00> : vector<4x32xf32>
    %18 = tpu.matmul %16, %17, %cst_10 {dimension_numbers = #tpu.dot_dimension_numbers<[1], [0], [0], [1], [0, 0, 1, 1], [], []>} : vector<4x64xf32>, vector<64x32xf32>, vector<4x32xf32> -> vector<4x32xf32>
    %19 = vector.broadcast %15 : vector<1x32xf32> to vector<4x32xf32>
    %20 = arith.addf %19, %18 : vector<4x32xf32>
    %21 = vector.extract_strided_slice %14 {offsets = [4, 0], sizes = [4, 64], strides = [1, 1]} : vector<16x64xf32> to vector<4x64xf32>
    %c64 = arith.constant 64 : index
    %c0_11 = arith.constant 0 : index
    %22 = vector.load %arg3[%c64, %c0_11] : memref<256x32xf32, #tpu.memory_space<vmem>>, vector<64x32xf32>
    %cst_12 = arith.constant dense<0.000000e+00> : vector<4x32xf32>
    %23 = tpu.matmul %21, %22, %cst_12 {dimension_numbers = #tpu.dot_dimension_numbers<[1], [0], [0], [1], [0, 0, 1, 1], [], []>} : vector<4x64xf32>, vector<64x32xf32>, vector<4x32xf32> -> vector<4x32xf32>
    %24 = arith.addf %20, %23 : vector<4x32xf32>
    %25 = vector.extract_strided_slice %14 {offsets = [8, 0], sizes = [4, 64], strides = [1, 1]} : vector<16x64xf32> to vector<4x64xf32>
    %c128 = arith.constant 128 : index
    %c0_13 = arith.constant 0 : index
    %26 = vector.load %arg3[%c128, %c0_13] : memref<256x32xf32, #tpu.memory_space<vmem>>, vector<64x32xf32>
    %cst_14 = arith.constant dense<0.000000e+00> : vector<4x32xf32>
    %27 = tpu.matmul %25, %26, %cst_14 {dimension_numbers = #tpu.dot_dimension_numbers<[1], [0], [0], [1], [0, 0, 1, 1], [], []>} : vector<4x64xf32>, vector<64x32xf32>, vector<4x32xf32> -> vector<4x32xf32>
    %28 = arith.addf %24, %27 : vector<4x32xf32>
    %29 = vector.extract_strided_slice %14 {offsets = [12, 0], sizes = [4, 64], strides = [1, 1]} : vector<16x64xf32> to vector<4x64xf32>
    %c192 = arith.constant 192 : index
    %c0_15 = arith.constant 0 : index
    %30 = vector.load %arg3[%c192, %c0_15] : memref<256x32xf32, #tpu.memory_space<vmem>>, vector<64x32xf32>
    %cst_16 = arith.constant dense<0.000000e+00> : vector<4x32xf32>
    %31 = tpu.matmul %29, %30, %cst_16 {dimension_numbers = #tpu.dot_dimension_numbers<[1], [0], [0], [1], [0, 0, 1, 1], [], []>} : vector<4x64xf32>, vector<64x32xf32>, vector<4x32xf32> -> vector<4x32xf32>
    %32 = arith.addf %28, %31 : vector<4x32xf32>
    %cst_17 = arith.constant 0.000000e+00 : f32
    %33 = vector.broadcast %cst_17 : f32 to vector<4x32xf32>
    %34 = arith.maximumf %32, %33 : vector<4x32xf32>
    %c0_18 = arith.constant 0 : index
    %c0_19 = arith.constant 0 : index
    %35 = vector.load %arg5[%c0_18, %c0_19] : memref<32x10xf32, #tpu.memory_space<vmem>>, vector<32x10xf32>
    %cst_20 = arith.constant dense<0.000000e+00> : vector<4x10xf32>
    %36 = tpu.matmul %34, %35, %cst_20 {dimension_numbers = #tpu.dot_dimension_numbers<[1], [0], [0], [1], [0, 0, 1, 1], [], []>} : vector<4x32xf32>, vector<32x10xf32>, vector<4x10xf32> -> vector<4x10xf32>
    %c0_21 = arith.constant 0 : index
    %c0_22 = arith.constant 0 : index
    %37 = vector.load %arg6[%c0_21, %c0_22] : memref<1x10xf32, #tpu.memory_space<vmem>>, vector<1x10xf32>
    %38 = vector.broadcast %37 : vector<1x10xf32> to vector<4x10xf32>
    %39 = arith.addf %36, %38 : vector<4x10xf32>
    %c0_23 = arith.constant 0 : index
    %c0_24 = arith.constant 0 : index
    %40 = vector.load %arg14[%c0_23, %c0_24] : memref<4x10xf32, #tpu.memory_space<vmem>>, vector<4x10xf32>
    tpu.vector_store %arg14[%c0_23, %c0_24], %39 {strides = array<i32>} : memref<4x10xf32, #tpu.memory_space<vmem>>, vector<4x10xf32>,
    %41 = vector.extract_strided_slice %39 {offsets = [0, 0], sizes = [2, 10], strides = [1, 1]} : vector<4x10xf32> to vector<2x10xf32>
    %42 = vector.extract_strided_slice %39 {offsets = [2, 0], sizes = [2, 10], strides = [1, 1]} : vector<4x10xf32> to vector<2x10xf32>
    %c0_25 = arith.constant 0 : index
    %c0_26 = arith.constant 0 : index
    %43 = vector.load %arg7[%c0_25, %c0_26] : memref<10x60xf32, #tpu.memory_space<vmem>>, vector<10x60xf32>
    %cst_27 = arith.constant dense<0.000000e+00> : vector<2x60xf32>
    %44 = tpu.matmul %41, %43, %cst_27 {dimension_numbers = #tpu.dot_dimension_numbers<[1], [0], [0], [1], [0, 0, 1, 1], [], []>} : vector<2x10xf32>, vector<10x60xf32>, vector<2x60xf32> -> vector<2x60xf32>
    %c0_28 = arith.constant 0 : index
    %c0_29 = arith.constant 0 : index
    %45 = vector.load %arg8[%c0_28, %c0_29] : memref<10x60xf32, #tpu.memory_space<vmem>>, vector<10x60xf32>
    %cst_30 = arith.constant dense<0.000000e+00> : vector<2x60xf32>
    %46 = tpu.matmul %42, %45, %cst_30 {dimension_numbers = #tpu.dot_dimension_numbers<[1], [0], [0], [1], [0, 0, 1, 1], [], []>} : vector<2x10xf32>, vector<10x60xf32>, vector<2x60xf32> -> vector<2x60xf32>
    %47 = arith.addf %44, %46 : vector<2x60xf32>
    %c0_31 = arith.constant 0 : index
    %c0_32 = arith.constant 0 : index
    %48 = vector.load %arg9[%c0_31, %c0_32] : memref<1x60xf32, #tpu.memory_space<vmem>>, vector<1x60xf32>
    %49 = vector.broadcast %48 : vector<1x60xf32> to vector<2x60xf32>
    %50 = arith.addf %47, %49 : vector<2x60xf32>
    %cst_33 = arith.constant 0.000000e+00 : f32
    %51 = vector.broadcast %cst_33 : f32 to vector<2x60xf32>
    %52 = arith.maximumf %50, %51 : vector<2x60xf32>
    %c0_34 = arith.constant 0 : index
    %c0_35 = arith.constant 0 : index
    %53 = vector.load %arg10[%c0_34, %c0_35] : memref<60x90xf32, #tpu.memory_space<vmem>>, vector<60x90xf32>
    %cst_36 = arith.constant dense<0.000000e+00> : vector<2x90xf32>
    %54 = tpu.matmul %52, %53, %cst_36 {dimension_numbers = #tpu.dot_dimension_numbers<[1], [0], [0], [1], [0, 0, 1, 1], [], []>} : vector<2x60xf32>, vector<60x90xf32>, vector<2x90xf32> -> vector<2x90xf32>
    %c0_37 = arith.constant 0 : index
    %c0_38 = arith.constant 0 : index
    %55 = vector.load %arg11[%c0_37, %c0_38] : memref<1x90xf32, #tpu.memory_space<vmem>>, vector<1x90xf32>
    %56 = vector.broadcast %55 : vector<1x90xf32> to vector<2x90xf32>
    %57 = arith.addf %54, %56 : vector<2x90xf32>
    %cst_39 = arith.constant 0.000000e+00 : f32
    %58 = vector.broadcast %cst_39 : f32 to vector<2x90xf32>
    %59 = arith.maximumf %57, %58 : vector<2x90xf32>
    %c0_40 = arith.constant 0 : index
    %c0_41 = arith.constant 0 : index
    %60 = vector.load %arg12[%c0_40, %c0_41] : memref<90x2xf32, #tpu.memory_space<vmem>>, vector<90x2xf32>
    %cst_42 = arith.constant dense<0.000000e+00> : vector<2x2xf32>
    %61 = tpu.matmul %59, %60, %cst_42 {dimension_numbers = #tpu.dot_dimension_numbers<[1], [0], [0], [1], [0, 0, 1, 1], [], []>} : vector<2x90xf32>, vector<90x2xf32>, vector<2x2xf32> -> vector<2x2xf32>
    %c0_43 = arith.constant 0 : index
    %c0_44 = arith.constant 0 : index
    %62 = vector.load %arg13[%c0_43, %c0_44] : memref<1x2xf32, #tpu.memory_space<vmem>>, vector<1x2xf32>
    %63 = vector.broadcast %62 : vector<1x2xf32> to vector<2x2xf32>
    %64 = arith.addf %61, %63 : vector<2x2xf32>
    %c0_45 = arith.constant 0 : index
    %c0_46 = arith.constant 0 : index
    %65 = vector.load %arg15[%c0_45, %c0_46] : memref<2x2xf32, #tpu.memory_space<vmem>>, vector<2x2xf32>
    tpu.vector_store %arg15[%c0_45, %c0_46], %64 {strides = array<i32>} : memref<2x2xf32, #tpu.memory_space<vmem>>, vector<2x2xf32>,
    return
  }
}

</mosaic_0001>

<llo_original>
// kernel: compnet2_forward.2
$region0: #{compnet2_forward.2}
  #allocation0 [shape = 'u32[]', space=smem, size = 0x4, offset = 0x4, fixed_abs, tag = 'smem constant byte address 0x4 - core index']
  #allocation1 [shape = 'u32[144,128]{1,0:T(1,128)}', space=vmem, size = 0x12000, scoped, tag = 'internal scratch']
  %s0 = inlined_call_operand.vmem [shape: f32[576,9], index: 0, kind: input, shape index: {}]
  %s1 = inlined_call_operand.vmem [shape: f32[9,32], index: 1, kind: input, shape index: {}]
  %s2 = inlined_call_operand.vmem [shape: f32[1,32], index: 2, kind: input, shape index: {}]
  %s3 = inlined_call_operand.vmem [shape: f32[144,32], index: 3, kind: output, shape index: {}]
  %s4 = sld [smem:[#allocation0]]
  $region22: #{compnet2_forward.2} parent=0
    _
  %s6 = ssub.s32 1, %s4
  %s7 = scalar_select 0, %s6, %s4
  // Predicated region
  $region2: #{compnet2_forward.2} parent=0 // pred_check
    _
  $region3: #{compnet2_forward.2} parent=0 // pred_check_branch
    %9 = sbr.rel (0) target = $region5
  $region4: #{compnet2_forward.2} parent=0 // pred_region
    _
  $region5: #{compnet2_forward.2} parent=0 // pred_fallthru
    _
  // Predicated region
  $region6: #{compnet2_forward.2} parent=0 // pred_check
    _
  $region7: #{compnet2_forward.2} parent=0 // pred_check_branch
    %11 = sbr.rel (0) target = $region9
  $region8: #{compnet2_forward.2} parent=0 // pred_region
    _
  $region9: #{compnet2_forward.2} parent=0 // pred_fallthru
    _
  // Predicated region
  $region10: #{compnet2_forward.2} parent=0 // pred_check
    _
  $region11: #{compnet2_forward.2} parent=0 // pred_check_branch
    %13 = sbr.rel (0) target = $region13
  $region12: #{compnet2_forward.2} parent=0 // pred_region
    _
  $region13: #{compnet2_forward.2} parent=0 // pred_fallthru
    _
  %v14 = vld [vmem:[%s0] sm:$0xff]
  %v15 = vld [vmem:[%s0 + $0x8] sm:$0xff]
  %v16 = vld [vmem:[%s0 + $0x10] sm:$0xff]
  %v17 = vld [vmem:[%s0 + $0x18] sm:$0xff]
  %v18 = vld [vmem:[%s0 + $0x20] sm:$0xff]
  %v19 = vld [vmem:[%s0 + $0x28] sm:$0xff]
  %v20 = vld [vmem:[%s0 + $0x30] sm:$0xff]
  %v21 = vld [vmem:[%s0 + $0x38] sm:$0xff]
  %v22 = vld [vmem:[%s0 + $0x40] sm:$0xff]
  %v23 = vld [vmem:[%s0 + $0x48] sm:$0xff]
  %v24 = vld [vmem:[%s0 + $0x50] sm:$0xff]
  %v25 = vld [vmem:[%s0 + $0x58] sm:$0xff]
  %v26 = vld [vmem:[%s0 + $0x60] sm:$0xff]
  %v27 = vld [vmem:[%s0 + $0x68] sm:$0xff]
  %v28 = vld [vmem:[%s0 + $0x70] sm:$0xff]
  %v29 = vld [vmem:[%s0 + $0x78] sm:$0xff]
  %v30 = vld [vmem:[%s0 + $0x80] sm:$0xff]
  %v31 = vld [vmem:[%s0 + $0x88] sm:$0xff]
  %v32 = vld [vmem:[%s0 + $0x90] sm:$0xff]
  %v33 = vld [vmem:[%s0 + $0x98] sm:$0xff]
  %v34 = vld [vmem:[%s0 + $0xa0] sm:$0xff]
  %v35 = vld [vmem:[%s0 + $0xa8] sm:$0xff]
  %v36 = vld [vmem:[%s0 + $0xb0] sm:$0xff]
  %v37 = vld [vmem:[%s0 + $0xb8] sm:$0xff]
  %v38 = vld [vmem:[%s0 + $0xc0] sm:$0xff]
  %v39 = vld [vmem:[%s0 + $0xc8] sm:$0xff]
  %v40 = vld [vmem:[%s0 + $0xd0] sm:$0xff]
  %v41 = vld [vmem:[%s0 + $0xd8] sm:$0xff]
  %v42 = vld [vmem:[%s0 + $0xe0] sm:$0xff]
  %v43 = vld [vmem:[%s0 + $0xe8] sm:$0xff]
  %v44 = vld [vmem:[%s0 + $0xf0] sm:$0xff]
  %v45 = vld [vmem:[%s0 + $0xf8] sm:$0xff]
  %v46 = vld [vmem:[%s0 + $0x100] sm:$0xff]
  %v47 = vld [vmem:[%s0 + $0x108] sm:$0xff]
  %v48 = vld [vmem:[%s0 + $0x110] sm:$0xff]
  %v49 = vld [vmem:[%s0 + $0x118] sm:$0xff]
  %v50 = vld [vmem:[%s0 + $0x120] sm:$0xff]
  %v51 = vld [vmem:[%s0 + $0x128] sm:$0xff]
  %v52 = vld [vmem:[%s0 + $0x130] sm:$0xff]
  %v53 = vld [vmem:[%s0 + $0x138] sm:$0xff]
  %v54 = vld [vmem:[%s0 + $0x140] sm:$0xff]
  %v55 = vld [vmem:[%s0 + $0x148] sm:$0xff]
  %v56 = vld [vmem:[%s0 + $0x150] sm:$0xff]
  %v57 = vld [vmem:[%s0 + $0x158] sm:$0xff]
  %v58 = vld [vmem:[%s0 + $0x160] sm:$0xff]
  %v59 = vld [vmem:[%s0 + $0x168] sm:$0xff]
  %v60 = vld [vmem:[%s0 + $0x170] sm:$0xff]
  %v61 = vld [vmem:[%s0 + $0x178] sm:$0xff]
  %v62 = vld [vmem:[%s0 + $0x180] sm:$0xff]
  %v63 = vld [vmem:[%s0 + $0x188] sm:$0xff]
  %v64 = vld [vmem:[%s0 + $0x190] sm:$0xff]
  %v65 = vld [vmem:[%s0 + $0x198] sm:$0xff]
  %v66 = vld [vmem:[%s0 + $0x1a0] sm:$0xff]
  %v67 = vld [vmem:[%s0 + $0x1a8] sm:$0xff]
  %v68 = vld [vmem:[%s0 + $0x1b0] sm:$0xff]
  %v69 = vld [vmem:[%s0 + $0x1b8] sm:$0xff]
  %v70 = vld [vmem:[%s0 + $0x1c0] sm:$0xff]
  %v71 = vld [vmem:[%s0 + $0x1c8] sm:$0xff]
  %v72 = vld [vmem:[%s0 + $0x1d0] sm:$0xff]
  %v73 = vld [vmem:[%s0 + $0x1d8] sm:$0xff]
  %v74 = vld [vmem:[%s0 + $0x1e0] sm:$0xff]
  %v75 = vld [vmem:[%s0 + $0x1e8] sm:$0xff]
  %v76 = vld [vmem:[%s0 + $0x1f0] sm:$0xff]
  %v77 = vld [vmem:[%s0 + $0x1f8] sm:$0xff]
  %v78 = vld [vmem:[%s0 + $0x200] sm:$0xff]
  %v79 = vld [vmem:[%s0 + $0x208] sm:$0xff]
  %v80 = vld [vmem:[%s0 + $0x210] sm:$0xff]
  %v81 = vld [vmem:[%s0 + $0x218] sm:$0xff]
  %v82 = vld [vmem:[%s0 + $0x220] sm:$0xff]
  %v83 = vld [vmem:[%s0 + $0x228] sm:$0xff]
  %v84 = vld [vmem:[%s0 + $0x230] sm:$0xff]
  %v85 = vld [vmem:[%s0 + $0x238] sm:$0xff]
  %v86 = vld [vmem:[%s1] sm:$0xff]
  %v87 = vld [vmem:[%s1 + $0x8] sm:$0x1]
  %v88 = vld [vmem:[%s2] sm:$0x1]
  %v90 = vlaneseq
  %v91 = vshrl.u32 %v90, 7
  %v92 = vsub.s32 0, %v91
  %v93 = vrot.slane %v88, %v92
  %vm95 = vcmask 72704
  %v97 = vsel %vm95, %v14, 0
  %v100 = vsel %vm95, %v15, 0
  %v103 = vsel %vm95, %v16, 0
  %v106 = vsel %vm95, %v17, 0
  %v109 = vsel %vm95, %v18, 0
  %v112 = vsel %vm95, %v19, 0
  %v115 = vsel %vm95, %v20, 0
  %v118 = vsel %vm95, %v21, 0
  %v121 = vsel %vm95, %v22, 0
  %v124 = vsel %vm95, %v23, 0
  %v127 = vsel %vm95, %v24, 0
  %v130 = vsel %vm95, %v25, 0
  %v133 = vsel %vm95, %v26, 0
  %v136 = vsel %vm95, %v27, 0
  %v139 = vsel %vm95, %v28, 0
  %v142 = vsel %vm95, %v29, 0
  %v145 = vsel %vm95, %v30, 0
  %v148 = vsel %vm95, %v31, 0
  %v151 = vsel %vm95, %v32, 0
  %v154 = vsel %vm95, %v33, 0
  %v157 = vsel %vm95, %v34, 0
  %v160 = vsel %vm95, %v35, 0
  %v163 = vsel %vm95, %v36, 0
  %v166 = vsel %vm95, %v37, 0
  %v169 = vsel %vm95, %v38, 0
  %v172 = vsel %vm95, %v39, 0
  %v175 = vsel %vm95, %v40, 0
  %v178 = vsel %vm95, %v41, 0
  %v181 = vsel %vm95, %v42, 0
  %v184 = vsel %vm95, %v43, 0
  %v187 = vsel %vm95, %v44, 0
  %v190 = vsel %vm95, %v45, 0
  %v193 = vsel %vm95, %v46, 0
  %v196 = vsel %vm95, %v47, 0
  %v199 = vsel %vm95, %v48, 0
  %v202 = vsel %vm95, %v49, 0
  %v205 = vsel %vm95, %v50, 0
  %v208 = vsel %vm95, %v51, 0
  %v211 = vsel %vm95, %v52, 0
  %v214 = vsel %vm95, %v53, 0
  %v217 = vsel %vm95, %v54, 0
  %v220 = vsel %vm95, %v55, 0
  %v223 = vsel %vm95, %v56, 0
  %v226 = vsel %vm95, %v57, 0
  %v229 = vsel %vm95, %v58, 0
  %v232 = vsel %vm95, %v59, 0
  %v235 = vsel %vm95, %v60, 0
  %v238 = vsel %vm95, %v61, 0
  %v241 = vsel %vm95, %v62, 0
  %v244 = vsel %vm95, %v63, 0
  %v247 = vsel %vm95, %v64, 0
  %v250 = vsel %vm95, %v65, 0
  %v253 = vsel %vm95, %v66, 0
  %v256 = vsel %vm95, %v67, 0
  %v259 = vsel %vm95, %v68, 0
  %v262 = vsel %vm95, %v69, 0
  %v265 = vsel %vm95, %v70, 0
  %v268 = vsel %vm95, %v71, 0
  %v271 = vsel %vm95, %v72, 0
  %v274 = vsel %vm95, %v73, 0
  %v277 = vsel %vm95, %v74, 0
  %v280 = vsel %vm95, %v75, 0
  %v283 = vsel %vm95, %v76, 0
  %v286 = vsel %vm95, %v77, 0
  %v289 = vsel %vm95, %v78, 0
  %v292 = vsel %vm95, %v79, 0
  %v295 = vsel %vm95, %v80, 0
  %v298 = vsel %vm95, %v81, 0
  %v301 = vsel %vm95, %v82, 0
  %v304 = vsel %vm95, %v83, 0
  %v307 = vsel %vm95, %v84, 0
  %v310 = vsel %vm95, %v85, 0
  %vm312 = vcmask 1040384
  %v314 = vsel %vm312, %v87, 0
  %316 = vmatprep.subr.mxu0 0.0
  %317 = vmatpush1.msra.mxu0 %v86
  %318 = vmatprep.subr.mxu0 0.0
  %319 = vmatpush1.msra.mxu0 %v314
  %320 = vmatprep.subr.mxu0 0.0
  %321 = vmatpush1.msra.mxu0 0.0
  %322 = vmatprep.subr.mxu0 0.0
  %323 = vmatpush1.msra.mxu0 0.0
  %324 = vmatprep.subr.mxu0 0.0
  %325 = vmatpush1.msra.mxu0 0.0
  %326 = vmatprep.subr.mxu0 0.0
  %327 = vmatpush1.msra.mxu0 0.0
  %328 = vmatprep.subr.mxu0 0.0
  %329 = vmatpush1.msra.mxu0 0.0
  %330 = vmatprep.subr.mxu0 0.0
  %331 = vmatpush1.msra.mxu0 0.0
  %332 = vmatprep.subr.mxu0 0.0
  %333 = vmatpush1.msra.mxu0 0.0
  %334 = vmatprep.subr.mxu0 0.0
  %335 = vmatpush1.msra.mxu0 0.0
  %336 = vmatprep.subr.mxu0 0.0
  %337 = vmatpush1.msra.mxu0 0.0
  %338 = vmatprep.subr.mxu0 0.0
  %339 = vmatpush1.msra.mxu0 0.0
  %340 = vmatprep.subr.mxu0 0.0
  %341 = vmatpush1.msra.mxu0 0.0
  %342 = vmatprep.subr.mxu0 0.0
  %343 = vmatpush1.msra.mxu0 0.0
  %344 = vmatprep.subr.mxu0 0.0
  %345 = vmatpush1.msra.mxu0 0.0
  %346 = vmatprep.subr.mxu0 0.0
  %347 = vmatpush1.msra.mxu0 0.0
  %348 = vmatprep.subr.mxu0 0.0
  %349 = vmatpush1.msra.mxu0 0.0
  %350 = vmatprep.subr.mxu0 0.0
  %351 = vmatpush1.msra.mxu0 0.0
  %352 = vmatprep.subr.mxu0 0.0
  %353 = vmatpush1.msra.mxu0 0.0
  %354 = vmatprep.subr.mxu0 0.0
  %355 = vmatpush1.msra.mxu0 0.0
  %356 = vmatprep.subr.mxu0 0.0
  %357 = vmatpush1.msra.mxu0 0.0
  %358 = vmatprep.subr.mxu0 0.0
  %359 = vmatpush1.msra.mxu0 0.0
  %360 = vmatprep.subr.mxu0 0.0
  %361 = vmatpush1.msra.mxu0 0.0
  %362 = vmatprep.subr.mxu0 0.0
  %363 = vmatpush1.msra.mxu0 0.0
  %364 = vmatprep.subr.mxu0 0.0
  %365 = vmatpush1.msra.mxu0 0.0
  %366 = vmatprep.subr.mxu0 0.0
  %367 = vmatpush1.msra.mxu0 0.0
  %368 = vmatprep.subr.mxu0 0.0
  %369 = vmatpush1.msra.mxu0 0.0
  %370 = vmatprep.subr.mxu0 0.0
  %371 = vmatpush1.msra.mxu0 0.0
  %372 = vmatprep.subr.mxu0 0.0
  %373 = vmatpush1.msra.mxu0 0.0
  %374 = vmatprep.subr.mxu0 0.0
  %375 = vmatpush1.msra.mxu0 0.0
  %376 = vmatprep.subr.mxu0 0.0
  %377 = vmatpush1.msra.mxu0 0.0
  %378 = vmatprep.subr.mxu0 0.0
  %379 = vmatpush1.msra.mxu0 0.0
  %380 = vmatprep.mubr.f32.mxu0 0.0
  %381 = vmatmul.mubr.f32.gmra.mrb[0].mxu0 %v97
  %v382 = vpop.f32.mrb[0].mxu0
  %v383 = vadd.f32 %v93, %v382
  %v384 = vpop.f32.mrb[0].mxu0
  %385 = vmatprep.mubr.f32.mxu0 0.0
  %386 = vmatmul.mubr.f32.gmra.mrb[0].mxu0 %v100
  %v387 = vpop.f32.mrb[0].mxu0
  %v388 = vadd.f32 %v93, %v387
  %v389 = vpop.f32.mrb[0].mxu0
  %390 = vmatprep.mubr.f32.mxu0 0.0
  %391 = vmatmul.mubr.f32.gmra.mrb[0].mxu0 %v103
  %v392 = vpop.f32.mrb[0].mxu0
  %v393 = vadd.f32 %v93, %v392
  %v394 = vpop.f32.mrb[0].mxu0
  %395 = vmatprep.mubr.f32.mxu0 0.0
  %396 = vmatmul.mubr.f32.gmra.mrb[0].mxu0 %v106
  %v397 = vpop.f32.mrb[0].mxu0
  %v398 = vadd.f32 %v93, %v397
  %v399 = vpop.f32.mrb[0].mxu0
  %400 = vmatprep.mubr.f32.mxu0 0.0
  %401 = vmatmul.mubr.f32.gmra.mrb[0].mxu0 %v109
  %v402 = vpop.f32.mrb[0].mxu0
  %v403 = vadd.f32 %v93, %v402
  %v404 = vpop.f32.mrb[0].mxu0
  %405 = vmatprep.mubr.f32.mxu0 0.0
  %406 = vmatmul.mubr.f32.gmra.mrb[0].mxu0 %v112
  %v407 = vpop.f32.mrb[0].mxu0
  %v408 = vadd.f32 %v93, %v407
  %v409 = vpop.f32.mrb[0].mxu0
  %410 = vmatprep.mubr.f32.mxu0 0.0
  %411 = vmatmul.mubr.f32.gmra.mrb[0].mxu0 %v115
  %v412 = vpop.f32.mrb[0].mxu0
  %v413 = vadd.f32 %v93, %v412
  %v414 = vpop.f32.mrb[0].mxu0
  %415 = vmatprep.mubr.f32.mxu0 0.0
  %416 = vmatmul.mubr.f32.gmra.mrb[0].mxu0 %v118
  %v417 = vpop.f32.mrb[0].mxu0
  %v418 = vadd.f32 %v93, %v417
  %v419 = vpop.f32.mrb[0].mxu0
  %420 = vmatprep.mubr.f32.mxu0 0.0
  %421 = vmatmul.mubr.f32.gmra.mrb[0].mxu0 %v121
  %v422 = vpop.f32.mrb[0].mxu0
  %v423 = vadd.f32 %v93, %v422
  %v424 = vpop.f32.mrb[0].mxu0
  %425 = vmatprep.mubr.f32.mxu0 0.0
  %426 = vmatmul.mubr.f32.gmra.mrb[0].mxu0 %v124
  %v427 = vpop.f32.mrb[0].mxu0
  %v428 = vadd.f32 %v93, %v427
  %v429 = vpop.f32.mrb[0].mxu0
  %430 = vmatprep.mubr.f32.mxu0 0.0
  %431 = vmatmul.mubr.f32.gmra.mrb[0].mxu0 %v127
  %v432 = vpop.f32.mrb[0].mxu0
  %v433 = vadd.f32 %v93, %v432
  %v434 = vpop.f32.mrb[0].mxu0
  %435 = vmatprep.mubr.f32.mxu0 0.0
  %436 = vmatmul.mubr.f32.gmra.mrb[0].mxu0 %v130
  %v437 = vpop.f32.mrb[0].mxu0
  %v438 = vadd.f32 %v93, %v437
  %v439 = vpop.f32.mrb[0].mxu0
  %440 = vmatprep.mubr.f32.mxu0 0.0
  %441 = vmatmul.mubr.f32.gmra.mrb[0].mxu0 %v133
  %v442 = vpop.f32.mrb[0].mxu0
  %v443 = vadd.f32 %v93, %v442
  %v444 = vpop.f32.mrb[0].mxu0
  %445 = vmatprep.mubr.f32.mxu0 0.0
  %446 = vmatmul.mubr.f32.gmra.mrb[0].mxu0 %v136
  %v447 = vpop.f32.mrb[0].mxu0
  %v448 = vadd.f32 %v93, %v447
  %v449 = vpop.f32.mrb[0].mxu0
  %450 = vmatprep.mubr.f32.mxu0 0.0
  %451 = vmatmul.mubr.f32.gmra.mrb[0].mxu0 %v139
  %v452 = vpop.f32.mrb[0].mxu0
  %v453 = vadd.f32 %v93, %v452
  %v454 = vpop.f32.mrb[0].mxu0
  %455 = vmatprep.mubr.f32.mxu0 0.0
  %456 = vmatmul.mubr.f32.gmra.mrb[0].mxu0 %v142
  %v457 = vpop.f32.mrb[0].mxu0
  %v458 = vadd.f32 %v93, %v457
  %v459 = vpop.f32.mrb[0].mxu0
  %460 = vmatprep.mubr.f32.mxu0 0.0
  %461 = vmatmul.mubr.f32.gmra.mrb[0].mxu0 %v145
  %v462 = vpop.f32.mrb[0].mxu0
  %v463 = vadd.f32 %v93, %v462
  %v464 = vpop.f32.mrb[0].mxu0
  %465 = vmatprep.mubr.f32.mxu0 0.0
  %466 = vmatmul.mubr.f32.gmra.mrb[0].mxu0 %v148
  %v467 = vpop.f32.mrb[0].mxu0
  %v468 = vadd.f32 %v93, %v467
  %v469 = vpop.f32.mrb[0].mxu0
  %470 = vmatprep.mubr.f32.mxu0 0.0
  %471 = vmatmul.mubr.f32.gmra.mrb[0].mxu0 %v151
  %v472 = vpop.f32.mrb[0].mxu0
  %v473 = vadd.f32 %v93, %v472
  %v474 = vpop.f32.mrb[0].mxu0
  %475 = vmatprep.mubr.f32.mxu0 0.0
  %476 = vmatmul.mubr.f32.gmra.mrb[0].mxu0 %v154
  %v477 = vpop.f32.mrb[0].mxu0
  %v478 = vadd.f32 %v93, %v477
  %v479 = vpop.f32.mrb[0].mxu0
  %480 = vmatprep.mubr.f32.mxu0 0.0
  %481 = vmatmul.mubr.f32.gmra.mrb[0].mxu0 %v157
  %v482 = vpop.f32.mrb[0].mxu0
  %v483 = vadd.f32 %v93, %v482
  %v484 = vpop.f32.mrb[0].mxu0
  %485 = vmatprep.mubr.f32.mxu0 0.0
  %486 = vmatmul.mubr.f32.gmra.mrb[0].mxu0 %v160
  %v487 = vpop.f32.mrb[0].mxu0
  %v488 = vadd.f32 %v93, %v487
  %v489 = vpop.f32.mrb[0].mxu0
  %490 = vmatprep.mubr.f32.mxu0 0.0
  %491 = vmatmul.mubr.f32.gmra.mrb[0].mxu0 %v163
  %v492 = vpop.f32.mrb[0].mxu0
  %v493 = vadd.f32 %v93, %v492
  %v494 = vpop.f32.mrb[0].mxu0
  %495 = vmatprep.mubr.f32.mxu0 0.0
  %496 = vmatmul.mubr.f32.gmra.mrb[0].mxu0 %v166
  %v497 = vpop.f32.mrb[0].mxu0
  %v498 = vadd.f32 %v93, %v497
  %v499 = vpop.f32.mrb[0].mxu0
  %500 = vmatprep.mubr.f32.mxu0 0.0
  %501 = vmatmul.mubr.f32.gmra.mrb[0].mxu0 %v169
  %v502 = vpop.f32.mrb[0].mxu0
  %v503 = vadd.f32 %v93, %v502
  %v504 = vpop.f32.mrb[0].mxu0
  %505 = vmatprep.mubr.f32.mxu0 0.0
  %506 = vmatmul.mubr.f32.gmra.mrb[0].mxu0 %v172
  %v507 = vpop.f32.mrb[0].mxu0
  %v508 = vadd.f32 %v93, %v507
  %v509 = vpop.f32.mrb[0].mxu0
  %510 = vmatprep.mubr.f32.mxu0 0.0
  %511 = vmatmul.mubr.f32.gmra.mrb[0].mxu0 %v175
  %v512 = vpop.f32.mrb[0].mxu0
  %v513 = vadd.f32 %v93, %v512
  %v514 = vpop.f32.mrb[0].mxu0
  %515 = vmatprep.mubr.f32.mxu0 0.0
  %516 = vmatmul.mubr.f32.gmra.mrb[0].mxu0 %v178
  %v517 = vpop.f32.mrb[0].mxu0
  %v518 = vadd.f32 %v93, %v517
  %v519 = vpop.f32.mrb[0].mxu0
  %520 = vmatprep.mubr.f32.mxu0 0.0
  %521 = vmatmul.mubr.f32.gmra.mrb[0].mxu0 %v181
  %v522 = vpop.f32.mrb[0].mxu0
  %v523 = vadd.f32 %v93, %v522
  %v524 = vpop.f32.mrb[0].mxu0
  %525 = vmatprep.mubr.f32.mxu0 0.0
  %526 = vmatmul.mubr.f32.gmra.mrb[0].mxu0 %v184
  %v527 = vpop.f32.mrb[0].mxu0
  %v528 = vadd.f32 %v93, %v527
  %v529 = vpop.f32.mrb[0].mxu0
  %530 = vmatprep.mubr.f32.mxu0 0.0
  %531 = vmatmul.mubr.f32.gmra.mrb[0].mxu0 %v187
  %v532 = vpop.f32.mrb[0].mxu0
  %v533 = vadd.f32 %v93, %v532
  %v534 = vpop.f32.mrb[0].mxu0
  %535 = vmatprep.mubr.f32.mxu0 0.0
  %536 = vmatmul.mubr.f32.gmra.mrb[0].mxu0 %v190
  %v537 = vpop.f32.mrb[0].mxu0
  %v538 = vadd.f32 %v93, %v537
  %v539 = vpop.f32.mrb[0].mxu0
  %540 = vmatprep.mubr.f32.mxu0 0.0
  %541 = vmatmul.mubr.f32.gmra.mrb[0].mxu0 %v193
  %v542 = vpop.f32.mrb[0].mxu0
  %v543 = vadd.f32 %v93, %v542
  %v544 = vpop.f32.mrb[0].mxu0
  %545 = vmatprep.mubr.f32.mxu0 0.0
  %546 = vmatmul.mubr.f32.gmra.mrb[0].mxu0 %v196
  %v547 = vpop.f32.mrb[0].mxu0
  %v548 = vadd.f32 %v93, %v547
  %v549 = vpop.f32.mrb[0].mxu0
  %550 = vmatprep.mubr.f32.mxu0 0.0
  %551 = vmatmul.mubr.f32.gmra.mrb[0].mxu0 %v199
  %v552 = vpop.f32.mrb[0].mxu0
  %v553 = vadd.f32 %v93, %v552
  %v554 = vpop.f32.mrb[0].mxu0
  %555 = vmatprep.mubr.f32.mxu0 0.0
  %556 = vmatmul.mubr.f32.gmra.mrb[0].mxu0 %v202
  %v557 = vpop.f32.mrb[0].mxu0
  %v558 = vadd.f32 %v93, %v557
  %v559 = vpop.f32.mrb[0].mxu0
  %560 = vmatprep.mubr.f32.mxu0 0.0
  %561 = vmatmul.mubr.f32.gmra.mrb[0].mxu0 %v205
  %v562 = vpop.f32.mrb[0].mxu0
  %v563 = vadd.f32 %v93, %v562
  %v564 = vpop.f32.mrb[0].mxu0
  %565 = vmatprep.mubr.f32.mxu0 0.0
  %566 = vmatmul.mubr.f32.gmra.mrb[0].mxu0 %v208
  %v567 = vpop.f32.mrb[0].mxu0
  %v568 = vadd.f32 %v93, %v567
  %v569 = vpop.f32.mrb[0].mxu0
  %570 = vmatprep.mubr.f32.mxu0 0.0
  %571 = vmatmul.mubr.f32.gmra.mrb[0].mxu0 %v211
  %v572 = vpop.f32.mrb[0].mxu0
  %v573 = vadd.f32 %v93, %v572
  %v574 = vpop.f32.mrb[0].mxu0
  %575 = vmatprep.mubr.f32.mxu0 0.0
  %576 = vmatmul.mubr.f32.gmra.mrb[0].mxu0 %v214
  %v577 = vpop.f32.mrb[0].mxu0
  %v578 = vadd.f32 %v93, %v577
  %v579 = vpop.f32.mrb[0].mxu0
  %580 = vmatprep.mubr.f32.mxu0 0.0
  %581 = vmatmul.mubr.f32.gmra.mrb[0].mxu0 %v217
  %v582 = vpop.f32.mrb[0].mxu0
  %v583 = vadd.f32 %v93, %v582
  %v584 = vpop.f32.mrb[0].mxu0
  %585 = vmatprep.mubr.f32.mxu0 0.0
  %586 = vmatmul.mubr.f32.gmra.mrb[0].mxu0 %v220
  %v587 = vpop.f32.mrb[0].mxu0
  %v588 = vadd.f32 %v93, %v587
  %v589 = vpop.f32.mrb[0].mxu0
  %590 = vmatprep.mubr.f32.mxu0 0.0
  %591 = vmatmul.mubr.f32.gmra.mrb[0].mxu0 %v223
  %v592 = vpop.f32.mrb[0].mxu0
  %v593 = vadd.f32 %v93, %v592
  %v594 = vpop.f32.mrb[0].mxu0
  %595 = vmatprep.mubr.f32.mxu0 0.0
  %596 = vmatmul.mubr.f32.gmra.mrb[0].mxu0 %v226
  %v597 = vpop.f32.mrb[0].mxu0
  %v598 = vadd.f32 %v93, %v597
  %v599 = vpop.f32.mrb[0].mxu0
  %600 = vmatprep.mubr.f32.mxu0 0.0
  %601 = vmatmul.mubr.f32.gmra.mrb[0].mxu0 %v229
  %v602 = vpop.f32.mrb[0].mxu0
  %v603 = vadd.f32 %v93, %v602
  %v604 = vpop.f32.mrb[0].mxu0
  %605 = vmatprep.mubr.f32.mxu0 0.0
  %606 = vmatmul.mubr.f32.gmra.mrb[0].mxu0 %v232
  %v607 = vpop.f32.mrb[0].mxu0
  %v608 = vadd.f32 %v93, %v607
  %v609 = vpop.f32.mrb[0].mxu0
  %610 = vmatprep.mubr.f32.mxu0 0.0
  %611 = vmatmul.mubr.f32.gmra.mrb[0].mxu0 %v235
  %v612 = vpop.f32.mrb[0].mxu0
  %v613 = vadd.f32 %v93, %v612
  %v614 = vpop.f32.mrb[0].mxu0
  %615 = vmatprep.mubr.f32.mxu0 0.0
  %616 = vmatmul.mubr.f32.gmra.mrb[0].mxu0 %v238
  %v617 = vpop.f32.mrb[0].mxu0
  %v618 = vadd.f32 %v93, %v617
  %v619 = vpop.f32.mrb[0].mxu0
  %620 = vmatprep.mubr.f32.mxu0 0.0
  %621 = vmatmul.mubr.f32.gmra.mrb[0].mxu0 %v241
  %v622 = vpop.f32.mrb[0].mxu0
  %v623 = vadd.f32 %v93, %v622
  %v624 = vpop.f32.mrb[0].mxu0
  %625 = vmatprep.mubr.f32.mxu0 0.0
  %626 = vmatmul.mubr.f32.gmra.mrb[0].mxu0 %v244
  %v627 = vpop.f32.mrb[0].mxu0
  %v628 = vadd.f32 %v93, %v627
  %v629 = vpop.f32.mrb[0].mxu0
  %630 = vmatprep.mubr.f32.mxu0 0.0
  %631 = vmatmul.mubr.f32.gmra.mrb[0].mxu0 %v247
  %v632 = vpop.f32.mrb[0].mxu0
  %v633 = vadd.f32 %v93, %v632
  %v634 = vpop.f32.mrb[0].mxu0
  %635 = vmatprep.mubr.f32.mxu0 0.0
  %636 = vmatmul.mubr.f32.gmra.mrb[0].mxu0 %v250
  %v637 = vpop.f32.mrb[0].mxu0
  %v638 = vadd.f32 %v93, %v637
  %v639 = vpop.f32.mrb[0].mxu0
  %640 = vmatprep.mubr.f32.mxu0 0.0
  %641 = vmatmul.mubr.f32.gmra.mrb[0].mxu0 %v253
  %v642 = vpop.f32.mrb[0].mxu0
  %v643 = vadd.f32 %v93, %v642
  %v644 = vpop.f32.mrb[0].mxu0
  %645 = vmatprep.mubr.f32.mxu0 0.0
  %646 = vmatmul.mubr.f32.gmra.mrb[0].mxu0 %v256
  %v647 = vpop.f32.mrb[0].mxu0
  %v648 = vadd.f32 %v93, %v647
  %v649 = vpop.f32.mrb[0].mxu0
  %650 = vmatprep.mubr.f32.mxu0 0.0
  %651 = vmatmul.mubr.f32.gmra.mrb[0].mxu0 %v259
  %v652 = vpop.f32.mrb[0].mxu0
  %v653 = vadd.f32 %v93, %v652
  %v654 = vpop.f32.mrb[0].mxu0
  %655 = vmatprep.mubr.f32.mxu0 0.0
  %656 = vmatmul.mubr.f32.gmra.mrb[0].mxu0 %v262
  %v657 = vpop.f32.mrb[0].mxu0
  %v658 = vadd.f32 %v93, %v657
  %v659 = vpop.f32.mrb[0].mxu0
  %660 = vmatprep.mubr.f32.mxu0 0.0
  %661 = vmatmul.mubr.f32.gmra.mrb[0].mxu0 %v265
  %v662 = vpop.f32.mrb[0].mxu0
  %v663 = vadd.f32 %v93, %v662
  %v664 = vpop.f32.mrb[0].mxu0
  %665 = vmatprep.mubr.f32.mxu0 0.0
  %666 = vmatmul.mubr.f32.gmra.mrb[0].mxu0 %v268
  %v667 = vpop.f32.mrb[0].mxu0
  %v668 = vadd.f32 %v93, %v667
  %v669 = vpop.f32.mrb[0].mxu0
  %670 = vmatprep.mubr.f32.mxu0 0.0
  %671 = vmatmul.mubr.f32.gmra.mrb[0].mxu0 %v271
  %v672 = vpop.f32.mrb[0].mxu0
  %v673 = vadd.f32 %v93, %v672
  %v674 = vpop.f32.mrb[0].mxu0
  %675 = vmatprep.mubr.f32.mxu0 0.0
  %676 = vmatmul.mubr.f32.gmra.mrb[0].mxu0 %v274
  %v677 = vpop.f32.mrb[0].mxu0
  %v678 = vadd.f32 %v93, %v677
  %v679 = vpop.f32.mrb[0].mxu0
  %680 = vmatprep.mubr.f32.mxu0 0.0
  %681 = vmatmul.mubr.f32.gmra.mrb[0].mxu0 %v277
  %v682 = vpop.f32.mrb[0].mxu0
  %v683 = vadd.f32 %v93, %v682
  %v684 = vpop.f32.mrb[0].mxu0
  %685 = vmatprep.mubr.f32.mxu0 0.0
  %686 = vmatmul.mubr.f32.gmra.mrb[0].mxu0 %v280
  %v687 = vpop.f32.mrb[0].mxu0
  %v688 = vadd.f32 %v93, %v687
  %v689 = vpop.f32.mrb[0].mxu0
  %690 = vmatprep.mubr.f32.mxu0 0.0
  %691 = vmatmul.mubr.f32.gmra.mrb[0].mxu0 %v283
  %v692 = vpop.f32.mrb[0].mxu0
  %v693 = vadd.f32 %v93, %v692
  %v694 = vpop.f32.mrb[0].mxu0
  %695 = vmatprep.mubr.f32.mxu0 0.0
  %696 = vmatmul.mubr.f32.gmra.mrb[0].mxu0 %v286
  %v697 = vpop.f32.mrb[0].mxu0
  %v698 = vadd.f32 %v93, %v697
  %v699 = vpop.f32.mrb[0].mxu0
  %700 = vmatprep.mubr.f32.mxu0 0.0
  %701 = vmatmul.mubr.f32.gmra.mrb[0].mxu0 %v289
  %v702 = vpop.f32.mrb[0].mxu0
  %v703 = vadd.f32 %v93, %v702
  %v704 = vpop.f32.mrb[0].mxu0
  %705 = vmatprep.mubr.f32.mxu0 0.0
  %706 = vmatmul.mubr.f32.gmra.mrb[0].mxu0 %v292
  %v707 = vpop.f32.mrb[0].mxu0
  %v708 = vadd.f32 %v93, %v707
  %v709 = vpop.f32.mrb[0].mxu0
  %710 = vmatprep.mubr.f32.mxu0 0.0
  %711 = vmatmul.mubr.f32.gmra.mrb[0].mxu0 %v295
  %v712 = vpop.f32.mrb[0].mxu0
  %v713 = vadd.f32 %v93, %v712
  %v714 = vpop.f32.mrb[0].mxu0
  %715 = vmatprep.mubr.f32.mxu0 0.0
  %716 = vmatmul.mubr.f32.gmra.mrb[0].mxu0 %v298
  %v717 = vpop.f32.mrb[0].mxu0
  %v718 = vadd.f32 %v93, %v717
  %v719 = vpop.f32.mrb[0].mxu0
  %720 = vmatprep.mubr.f32.mxu0 0.0
  %721 = vmatmul.mubr.f32.gmra.mrb[0].mxu0 %v301
  %v722 = vpop.f32.mrb[0].mxu0
  %v723 = vadd.f32 %v93, %v722
  %v724 = vpop.f32.mrb[0].mxu0
  %725 = vmatprep.mubr.f32.mxu0 0.0
  %726 = vmatmul.mubr.f32.gmra.mrb[0].mxu0 %v304
  %v727 = vpop.f32.mrb[0].mxu0
  %v728 = vadd.f32 %v93, %v727
  %v729 = vpop.f32.mrb[0].mxu0
  %730 = vmatprep.mubr.f32.mxu0 0.0
  %731 = vmatmul.mubr.f32.gmra.mrb[0].mxu0 %v307
  %v732 = vpop.f32.mrb[0].mxu0
  %v733 = vadd.f32 %v93, %v732
  %v734 = vpop.f32.mrb[0].mxu0
  %735 = vmatprep.mubr.f32.mxu0 0.0
  %736 = vmatmul.mubr.f32.gmra.mrb[0].mxu0 %v310
  %v737 = vpop.f32.mrb[0].mxu0
  %v738 = vadd.f32 %v93, %v737
  %v739 = vpop.f32.mrb[0].mxu0
  %740 = vdwg.mxu0
  %v741 = vmax.f32 %v383, %v473
  %v742 = vmax.f32 %v388, %v478
  %v743 = vmax.f32 %v393, %v483
  %v744 = vmax.f32 %v398, %v488
  %v745 = vmax.f32 %v403, %v493
  %v746 = vmax.f32 %v408, %v498
  %v747 = vmax.f32 %v413, %v503
  %v748 = vmax.f32 %v418, %v508
  %v749 = vmax.f32 %v423, %v513
  %v750 = vmax.f32 %v428, %v518
  %v751 = vmax.f32 %v433, %v523
  %v752 = vmax.f32 %v438, %v528
  %v753 = vmax.f32 %v443, %v533
  %v754 = vmax.f32 %v448, %v538
  %v755 = vmax.f32 %v453, %v543
  %v756 = vmax.f32 %v458, %v548
  %v757 = vmax.f32 %v463, %v553
  %v758 = vmax.f32 %v468, %v558
  %v759 = vmax.f32 %v563, %v653
  %v760 = vmax.f32 %v568, %v658
  %v761 = vmax.f32 %v573, %v663
  %v762 = vmax.f32 %v578, %v668
  %v763 = vmax.f32 %v583, %v673
  %v764 = vmax.f32 %v588, %v678
  %v765 = vmax.f32 %v593, %v683
  %v766 = vmax.f32 %v598, %v688
  %v767 = vmax.f32 %v603, %v693
  %v768 = vmax.f32 %v608, %v698
  %v769 = vmax.f32 %v613, %v703
  %v770 = vmax.f32 %v618, %v708
  %v771 = vmax.f32 %v623, %v713
  %v772 = vmax.f32 %v628, %v718
  %v773 = vmax.f32 %v633, %v723
  %v774 = vmax.f32 %v638, %v728
  %v775 = vmax.f32 %v643, %v733
  %v776 = vmax.f32 %v648, %v738
  %v777 = vmax.f32 %v741, %v759
  %v778 = vmax.f32 %v742, %v760
  %v779 = vmax.f32 %v743, %v761
  %v780 = vmax.f32 %v744, %v762
  %v781 = vmax.f32 %v745, %v763
  %v782 = vmax.f32 %v746, %v764
  %v783 = vmax.f32 %v747, %v765
  %v784 = vmax.f32 %v748, %v766
  %v785 = vmax.f32 %v749, %v767
  %v786 = vmax.f32 %v750, %v768
  %v787 = vmax.f32 %v751, %v769
  %v788 = vmax.f32 %v752, %v770
  %v789 = vmax.f32 %v753, %v771
  %v790 = vmax.f32 %v754, %v772
  %v791 = vmax.f32 %v755, %v773
  %v792 = vmax.f32 %v756, %v774
  %v793 = vmax.f32 %v757, %v775
  %v794 = vmax.f32 %v758, %v776
  %v795 = vmax.f32 %v777, 0.0
  %v796 = vmax.f32 %v778, 0.0
  %v797 = vmax.f32 %v779, 0.0
  %v798 = vmax.f32 %v780, 0.0
  %v799 = vmax.f32 %v781, 0.0
  %v800 = vmax.f32 %v782, 0.0
  %v801 = vmax.f32 %v783, 0.0
  %v802 = vmax.f32 %v784, 0.0
  %v803 = vmax.f32 %v785, 0.0
  %v804 = vmax.f32 %v786, 0.0
  %v805 = vmax.f32 %v787, 0.0
  %v806 = vmax.f32 %v788, 0.0
  %v807 = vmax.f32 %v789, 0.0
  %v808 = vmax.f32 %v790, 0.0
  %v809 = vmax.f32 %v791, 0.0
  %v810 = vmax.f32 %v792, 0.0
  %v811 = vmax.f32 %v793, 0.0
  %v812 = vmax.f32 %v794, 0.0
  %vm813 = vcmask 261120
  %814 = vst.msk [vmem:[%s3] sm:$0xff] %vm813, %v795
  %815 = vst.msk [vmem:[%s3 + $0x8] sm:$0xff] %vm813, %v796
  %816 = vst.msk [vmem:[%s3 + $0x10] sm:$0xff] %vm813, %v797
  %817 = vst.msk [vmem:[%s3 + $0x18] sm:$0xff] %vm813, %v798
  %818 = vst.msk [vmem:[%s3 + $0x20] sm:$0xff] %vm813, %v799
  %819 = vst.msk [vmem:[%s3 + $0x28] sm:$0xff] %vm813, %v800
  %820 = vst.msk [vmem:[%s3 + $0x30] sm:$0xff] %vm813, %v801
  %821 = vst.msk [vmem:[%s3 + $0x38] sm:$0xff] %vm813, %v802
  %822 = vst.msk [vmem:[%s3 + $0x40] sm:$0xff] %vm813, %v803
  %823 = vst.msk [vmem:[%s3 + $0x48] sm:$0xff] %vm813, %v804
  %824 = vst.msk [vmem:[%s3 + $0x50] sm:$0xff] %vm813, %v805
  %825 = vst.msk [vmem:[%s3 + $0x58] sm:$0xff] %vm813, %v806
  %826 = vst.msk [vmem:[%s3 + $0x60] sm:$0xff] %vm813, %v807
  %827 = vst.msk [vmem:[%s3 + $0x68] sm:$0xff] %vm813, %v808
  %828 = vst.msk [vmem:[%s3 + $0x70] sm:$0xff] %vm813, %v809
  %829 = vst.msk [vmem:[%s3 + $0x78] sm:$0xff] %vm813, %v810
  %830 = vst.msk [vmem:[%s3 + $0x80] sm:$0xff] %vm813, %v811
  %831 = vst.msk [vmem:[%s3 + $0x88] sm:$0xff] %vm813, %v812
  // Predicated region
  $region14: #{compnet2_forward.2} parent=0 // pred_check
    _
  $region15: #{compnet2_forward.2} parent=0 // pred_check_branch
    %833 = sbr.rel (0) target = $region17
  $region16: #{compnet2_forward.2} parent=0 // pred_region
    _
  $region17: #{compnet2_forward.2} parent=0 // pred_fallthru
    _
  // Predicated region
  $region18: #{compnet2_forward.2} parent=0 // pred_check
    _
  $region19: #{compnet2_forward.2} parent=0 // pred_check_branch
    %835 = sbr.rel (0) target = $region21
  $region20: #{compnet2_forward.2} parent=0 // pred_region
    _
  $region21: #{compnet2_forward.2} parent=0 // pred_fallthru
    _

// kernel: compnet2_forward.3
$region0: #{compnet2_forward.3}
  #allocation0 [shape = 'u32[]', space=smem, size = 0x4, offset = 0x4, fixed_abs, tag = 'smem constant byte address 0x4 - core index']
  #allocation1 [shape = 'u32[144,128]{1,0:T(1,128)}', space=vmem, size = 0x12000, scoped, tag = 'internal scratch']
  %s0 = inlined_call_operand.vmem [shape: f32[64,288], index: 0, kind: input, shape index: {}]
  %s1 = inlined_call_operand.vmem [shape: f32[288,64], index: 1, kind: input, shape index: {}]
  %s2 = inlined_call_operand.vmem [shape: f32[1,64], index: 2, kind: input, shape index: {}]
  %s3 = inlined_call_operand.vmem [shape: f32[256,32], index: 3, kind: input, shape index: {}]
  %s4 = inlined_call_operand.vmem [shape: f32[1,32], index: 4, kind: input, shape index: {}]
  %s5 = inlined_call_operand.vmem [shape: f32[32,10], index: 5, kind: input, shape index: {}]
  %s6 = inlined_call_operand.vmem [shape: f32[1,10], index: 6, kind: input, shape index: {}]
  %s7 = inlined_call_operand.vmem [shape: f32[10,60], index: 7, kind: input, shape index: {}]
  %s8 = inlined_call_operand.vmem [shape: f32[10,60], index: 8, kind: input, shape index: {}]
  %s9 = inlined_call_operand.vmem [shape: f32[1,60], index: 9, kind: input, shape index: {}]
  %s10 = inlined_call_operand.vmem [shape: f32[60,90], index: 10, kind: input, shape index: {}]
  %s11 = inlined_call_operand.vmem [shape: f32[1,90], index: 11, kind: input, shape index: {}]
  %s12 = inlined_call_operand.vmem [shape: f32[90,2], index: 12, kind: input, shape index: {}]
  %s13 = inlined_call_operand.vmem [shape: f32[1,2], index: 13, kind: input, shape index: {}]
  %s14 = inlined_call_operand.vmem [shape: f32[4,10], index: 14, kind: output, shape index: {0}]
  %s15 = inlined_call_operand.hbm [shape: f32[2,2], index: 15, kind: output, shape index: {1}]
  %16 = xla_tuple %s14, %s15
  %s17 = sld [smem:[#allocation0]]
  $region74: #{compnet2_forward.3} parent=0
    _
  %s19 = ssub.s32 1, %s17
  %s20 = scalar_select 0, %s19, %s17
  $region1: #{compnet2_forward.3} parent=0
    #allocation2 [shape = 'u8[1024]{0}', space=vmem, size = 0x400, scoped, tag = 'output window, operand 1, single buffered']
    #allocation3 [shape = 's32[1]{0}', space=sflag, size = 0x4, scoped, tag = 'scoped memory for compnet2_forward.3']
    %21 = vsyncpa [#allocation3], 0
    // Predicated region
    $region2: #{compnet2_forward.3} parent=1 // pred_check
      _
    $region3: #{compnet2_forward.3} parent=1 // pred_check_branch
      %23 = sbr.rel (0) target = $region5
    $region4: #{compnet2_forward.3} parent=1 // pred_region
      _
    $region5: #{compnet2_forward.3} parent=1 // pred_fallthru
      _
    // Predicated region
    $region6: #{compnet2_forward.3} parent=1 // pred_check
      _
    $region7: #{compnet2_forward.3} parent=1 // pred_check_branch
      %25 = sbr.rel (0) target = $region9
    $region8: #{compnet2_forward.3} parent=1 // pred_region
      _
    $region9: #{compnet2_forward.3} parent=1 // pred_fallthru
      _
    // Predicated region
    $region10: #{compnet2_forward.3} parent=1 // pred_check
      _
    $region11: #{compnet2_forward.3} parent=1 // pred_check_branch
      %27 = sbr.rel (0) target = $region13
    $region12: #{compnet2_forward.3} parent=1 // pred_region
      _
    $region13: #{compnet2_forward.3} parent=1 // pred_fallthru
      _
    // Predicated region
    $region14: #{compnet2_forward.3} parent=1 // pred_check
      _
    $region15: #{compnet2_forward.3} parent=1 // pred_check_branch
      %29 = sbr.rel (0) target = $region17
    $region16: #{compnet2_forward.3} parent=1 // pred_region
      _
    $region17: #{compnet2_forward.3} parent=1 // pred_fallthru
      _
    // Predicated region
    $region18: #{compnet2_forward.3} parent=1 // pred_check
      _
    $region19: #{compnet2_forward.3} parent=1 // pred_check_branch
      %31 = sbr.rel (0) target = $region21
    $region20: #{compnet2_forward.3} parent=1 // pred_region
      _
    $region21: #{compnet2_forward.3} parent=1 // pred_fallthru
      _
    // Predicated region
    $region22: #{compnet2_forward.3} parent=1 // pred_check
      _
    $region23: #{compnet2_forward.3} parent=1 // pred_check_branch
      %33 = sbr.rel (0) target = $region25
    $region24: #{compnet2_forward.3} parent=1 // pred_region
      _
    $region25: #{compnet2_forward.3} parent=1 // pred_fallthru
      _
    // Predicated region
    $region26: #{compnet2_forward.3} parent=1 // pred_check
      _
    $region27: #{compnet2_forward.3} parent=1 // pred_check_branch
      %35 = sbr.rel (0) target = $region29
    $region28: #{compnet2_forward.3} parent=1 // pred_region
      _
    $region29: #{compnet2_forward.3} parent=1 // pred_fallthru
      _
    // Predicated region
    $region30: #{compnet2_forward.3} parent=1 // pred_check
      _
    $region31: #{compnet2_forward.3} parent=1 // pred_check_branch
      %37 = sbr.rel (0) target = $region33
    $region32: #{compnet2_forward.3} parent=1 // pred_region
      _
    $region33: #{compnet2_forward.3} parent=1 // pred_fallthru
      _
    // Predicated region
    $region34: #{compnet2_forward.3} parent=1 // pred_check
      _
    $region35: #{compnet2_forward.3} parent=1 // pred_check_branch
      %39 = sbr.rel (0) target = $region37
    $region36: #{compnet2_forward.3} parent=1 // pred_region
      _
    $region37: #{compnet2_forward.3} parent=1 // pred_fallthru
      _
    // Predicated region
    $region38: #{compnet2_forward.3} parent=1 // pred_check
      _
    $region39: #{compnet2_forward.3} parent=1 // pred_check_branch
      %41 = sbr.rel (0) target = $region41
    $region40: #{compnet2_forward.3} parent=1 // pred_region
      _
    $region41: #{compnet2_forward.3} parent=1 // pred_fallthru
      _
    // Predicated region
    $region42: #{compnet2_forward.3} parent=1 // pred_check
      _
    $region43: #{compnet2_forward.3} parent=1 // pred_check_branch
      %43 = sbr.rel (0) target = $region45
    $region44: #{compnet2_forward.3} parent=1 // pred_region
      _
    $region45: #{compnet2_forward.3} parent=1 // pred_fallthru
      _
    // Predicated region
    $region46: #{compnet2_forward.3} parent=1 // pred_check
      _
    $region47: #{compnet2_forward.3} parent=1 // pred_check_branch
      %45 = sbr.rel (0) target = $region49
    $region48: #{compnet2_forward.3} parent=1 // pred_region
      _
    $region49: #{compnet2_forward.3} parent=1 // pred_fallthru
      _
    // Predicated region
    $region50: #{compnet2_forward.3} parent=1 // pred_check
      _
    $region51: #{compnet2_forward.3} parent=1 // pred_check_branch
      %47 = sbr.rel (0) target = $region53
    $region52: #{compnet2_forward.3} parent=1 // pred_region
      _
    $region53: #{compnet2_forward.3} parent=1 // pred_fallthru
      _
    // Predicated region
    $region54: #{compnet2_forward.3} parent=1 // pred_check
      _
    $region55: #{compnet2_forward.3} parent=1 // pred_check_branch
      %49 = sbr.rel (0) target = $region57
    $region56: #{compnet2_forward.3} parent=1 // pred_region
      _
    $region57: #{compnet2_forward.3} parent=1 // pred_fallthru
      _
    %v50 = vld [vmem:[%s0] sm:$0xff]
    %v51 = vld [vmem:[%s0 + $0x8] sm:$0xff]
    %v52 = vld [vmem:[%s0 + $0x10] sm:$0xff]
    %v53 = vld [vmem:[%s0 + $0x18] sm:$0xff]
    %v54 = vld [vmem:[%s0 + $0x20] sm:$0xff]
    %v55 = vld [vmem:[%s0 + $0x28] sm:$0xff]
    %v56 = vld [vmem:[%s0 + $0x30] sm:$0xff]
    %v57 = vld [vmem:[%s0 + $0x38] sm:$0xff]
    %v58 = vld [vmem:[%s0 + $0x40] sm:$0xff]
    %v59 = vld [vmem:[%s0 + $0x48] sm:$0xff]
    %v60 = vld [vmem:[%s0 + $0x50] sm:$0xff]
    %v61 = vld [vmem:[%s0 + $0x58] sm:$0xff]
    %v62 = vld [vmem:[%s0 + $0x60] sm:$0xff]
    %v63 = vld [vmem:[%s0 + $0x68] sm:$0xff]
    %v64 = vld [vmem:[%s0 + $0x70] sm:$0xff]
    %v65 = vld [vmem:[%s0 + $0x78] sm:$0xff]
    %v66 = vld [vmem:[%s0 + $0x80] sm:$0xff]
    %v67 = vld [vmem:[%s0 + $0x88] sm:$0xff]
    %v68 = vld [vmem:[%s0 + $0x90] sm:$0xff]
    %v69 = vld [vmem:[%s0 + $0x98] sm:$0xff]
    %v70 = vld [vmem:[%s0 + $0xa0] sm:$0xff]
    %v71 = vld [vmem:[%s0 + $0xa8] sm:$0xff]
    %v72 = vld [vmem:[%s0 + $0xb0] sm:$0xff]
    %v73 = vld [vmem:[%s0 + $0xb8] sm:$0xff]
    %v74 = vld [vmem:[%s1] sm:$0xff]
    %v75 = vld [vmem:[%s1 + $0x8] sm:$0xff]
    %v76 = vld [vmem:[%s1 + $0x10] sm:$0xff]
    %v77 = vld [vmem:[%s1 + $0x18] sm:$0xff]
    %v78 = vld [vmem:[%s1 + $0x20] sm:$0xff]
    %v79 = vld [vmem:[%s1 + $0x28] sm:$0xff]
    %v80 = vld [vmem:[%s1 + $0x30] sm:$0xff]
    %v81 = vld [vmem:[%s1 + $0x38] sm:$0xff]
    %v82 = vld [vmem:[%s1 + $0x40] sm:$0xff]
    %v83 = vld [vmem:[%s1 + $0x48] sm:$0xff]
    %v84 = vld [vmem:[%s1 + $0x50] sm:$0xff]
    %v85 = vld [vmem:[%s1 + $0x58] sm:$0xff]
    %v86 = vld [vmem:[%s1 + $0x60] sm:$0xff]
    %v87 = vld [vmem:[%s1 + $0x68] sm:$0xff]
    %v88 = vld [vmem:[%s1 + $0x70] sm:$0xff]
    %v89 = vld [vmem:[%s1 + $0x78] sm:$0xff]
    %v90 = vld [vmem:[%s1 + $0x80] sm:$0xff]
    %v91 = vld [vmem:[%s1 + $0x88] sm:$0xff]
    %v92 = vld [vmem:[%s1 + $0x90] sm:$0xff]
    %v93 = vld [vmem:[%s1 + $0x98] sm:$0xff]
    %v94 = vld [vmem:[%s1 + $0xa0] sm:$0xff]
    %v95 = vld [vmem:[%s1 + $0xa8] sm:$0xff]
    %v96 = vld [vmem:[%s1 + $0xb0] sm:$0xff]
    %v97 = vld [vmem:[%s1 + $0xb8] sm:$0xff]
    %v98 = vld [vmem:[%s1 + $0xc0] sm:$0xff]
    %v99 = vld [vmem:[%s1 + $0xc8] sm:$0xff]
    %v100 = vld [vmem:[%s1 + $0xd0] sm:$0xff]
    %v101 = vld [vmem:[%s1 + $0xd8] sm:$0xff]
    %v102 = vld [vmem:[%s1 + $0xe0] sm:$0xff]
    %v103 = vld [vmem:[%s1 + $0xe8] sm:$0xff]
    %v104 = vld [vmem:[%s1 + $0xf0] sm:$0xff]
    %v105 = vld [vmem:[%s1 + $0xf8] sm:$0xff]
    %v106 = vld [vmem:[%s1 + $0x100] sm:$0xff]
    %v107 = vld [vmem:[%s1 + $0x108] sm:$0xff]
    %v108 = vld [vmem:[%s1 + $0x110] sm:$0xff]
    %v109 = vld [vmem:[%s1 + $0x118] sm:$0xff]
    %v110 = vld [vmem:[%s2] sm:$0x1]
    %v112 = vlaneseq
    %v113 = vshrl.u32 %v112, 7
    %v114 = vsub.s32 0, %v113
    %v115 = vrot.slane %v110, %v114
    %vm117 = vcmask 261120
    %v119 = vsel %vm117, %v52, 0
    %v122 = vsel %vm117, %v55, 0
    %v125 = vsel %vm117, %v58, 0
    %v128 = vsel %vm117, %v61, 0
    %v131 = vsel %vm117, %v64, 0
    %v134 = vsel %vm117, %v67, 0
    %v137 = vsel %vm117, %v70, 0
    %v140 = vsel %vm117, %v73, 0
    %142 = vmatprep.subr.mxu0 0.0
    %143 = vmatpush1.msra.mxu0 %v74
    %144 = vmatprep.subr.mxu0 0.0
    %145 = vmatpush1.msra.mxu0 %v75
    %146 = vmatprep.subr.mxu0 0.0
    %147 = vmatpush1.msra.mxu0 %v76
    %148 = vmatprep.subr.mxu0 0.0
    %149 = vmatpush1.msra.mxu0 %v77
    %150 = vmatprep.subr.mxu0 0.0
    %151 = vmatpush1.msra.mxu0 %v78
    %152 = vmatprep.subr.mxu0 0.0
    %153 = vmatpush1.msra.mxu0 %v79
    %154 = vmatprep.subr.mxu0 0.0
    %155 = vmatpush1.msra.mxu0 %v80
    %156 = vmatprep.subr.mxu0 0.0
    %157 = vmatpush1.msra.mxu0 %v81
    %158 = vmatprep.subr.mxu0 0.0
    %159 = vmatpush1.msra.mxu0 %v82
    %160 = vmatprep.subr.mxu0 0.0
    %161 = vmatpush1.msra.mxu0 %v83
    %162 = vmatprep.subr.mxu0 0.0
    %163 = vmatpush1.msra.mxu0 %v84
    %164 = vmatprep.subr.mxu0 0.0
    %165 = vmatpush1.msra.mxu0 %v85
    %166 = vmatprep.subr.mxu0 0.0
    %167 = vmatpush1.msra.mxu0 %v86
    %168 = vmatprep.subr.mxu0 0.0
    %169 = vmatpush1.msra.mxu0 %v87
    %170 = vmatprep.subr.mxu0 0.0
    %171 = vmatpush1.msra.mxu0 %v88
    %172 = vmatprep.subr.mxu0 0.0
    %173 = vmatpush1.msra.mxu0 %v89
    %174 = vmatprep.subr.mxu0 0.0
    %175 = vmatpush1.msra.mxu0 %v90
    %176 = vmatprep.subr.mxu0 0.0
    %177 = vmatpush1.msra.mxu0 %v91
    %178 = vmatprep.subr.mxu0 0.0
    %179 = vmatpush1.msra.mxu0 %v92
    %180 = vmatprep.subr.mxu0 0.0
    %181 = vmatpush1.msra.mxu0 %v93
    %182 = vmatprep.subr.mxu0 0.0
    %183 = vmatpush1.msra.mxu0 %v94
    %184 = vmatprep.subr.mxu0 0.0
    %185 = vmatpush1.msra.mxu0 %v95
    %186 = vmatprep.subr.mxu0 0.0
    %187 = vmatpush1.msra.mxu0 %v96
    %188 = vmatprep.subr.mxu0 0.0
    %189 = vmatpush1.msra.mxu0 %v97
    %190 = vmatprep.subr.mxu0 0.0
    %191 = vmatpush1.msra.mxu0 %v98
    %192 = vmatprep.subr.mxu0 0.0
    %193 = vmatpush1.msra.mxu0 %v99
    %194 = vmatprep.subr.mxu0 0.0
    %195 = vmatpush1.msra.mxu0 %v100
    %196 = vmatprep.subr.mxu0 0.0
    %197 = vmatpush1.msra.mxu0 %v101
    %198 = vmatprep.subr.mxu0 0.0
    %199 = vmatpush1.msra.mxu0 %v102
    %200 = vmatprep.subr.mxu0 0.0
    %201 = vmatpush1.msra.mxu0 %v103
    %202 = vmatprep.subr.mxu0 0.0
    %203 = vmatpush1.msra.mxu0 %v104
    %204 = vmatprep.subr.mxu0 0.0
    %205 = vmatpush1.msra.mxu0 %v105
    %206 = vmatprep.mubr.f32.mxu0 %v51
    %207 = vmatmul.mubr.f32.gmra.mrb[0].mxu0 %v50
    %v208 = vpop.f32.mrb[0].mxu0
    %v209 = vadd.f32 %v115, %v208
    %v210 = vpop.f32.mrb[0].mxu0
    %211 = vmatprep.mubr.f32.mxu0 %v54
    %212 = vmatmul.mubr.f32.gmra.mrb[0].mxu0 %v53
    %v213 = vpop.f32.mrb[0].mxu0
    %v214 = vadd.f32 %v115, %v213
    %v215 = vpop.f32.mrb[0].mxu0
    %216 = vmatprep.mubr.f32.mxu0 %v57
    %217 = vmatmul.mubr.f32.gmra.mrb[0].mxu0 %v56
    %v218 = vpop.f32.mrb[0].mxu0
    %v219 = vadd.f32 %v115, %v218
    %v220 = vpop.f32.mrb[0].mxu0
    %221 = vmatprep.mubr.f32.mxu0 %v60
    %222 = vmatmul.mubr.f32.gmra.mrb[0].mxu0 %v59
    %v223 = vpop.f32.mrb[0].mxu0
    %v224 = vadd.f32 %v115, %v223
    %v225 = vpop.f32.mrb[0].mxu0
    %226 = vmatprep.mubr.f32.mxu0 %v63
    %227 = vmatmul.mubr.f32.gmra.mrb[0].mxu0 %v62
    %v228 = vpop.f32.mrb[0].mxu0
    %v229 = vadd.f32 %v115, %v228
    %v230 = vpop.f32.mrb[0].mxu0
    %231 = vmatprep.mubr.f32.mxu0 %v66
    %232 = vmatmul.mubr.f32.gmra.mrb[0].mxu0 %v65
    %v233 = vpop.f32.mrb[0].mxu0
    %v234 = vadd.f32 %v115, %v233
    %v235 = vpop.f32.mrb[0].mxu0
    %236 = vmatprep.mubr.f32.mxu0 %v69
    %237 = vmatmul.mubr.f32.gmra.mrb[0].mxu0 %v68
    %v238 = vpop.f32.mrb[0].mxu0
    %v239 = vadd.f32 %v115, %v238
    %v240 = vpop.f32.mrb[0].mxu0
    %241 = vmatprep.mubr.f32.mxu0 %v72
    %242 = vmatmul.mubr.f32.gmra.mrb[0].mxu0 %v71
    %v243 = vpop.f32.mrb[0].mxu0
    %v244 = vadd.f32 %v115, %v243
    %v245 = vpop.f32.mrb[0].mxu0
    %246 = vdwg.mxu0
    %247 = vmatprep.subr.mxu0 0.0
    %248 = vmatpush1.msra.mxu0 %v106
    %249 = vmatprep.subr.mxu0 0.0
    %250 = vmatpush1.msra.mxu0 %v107
    %251 = vmatprep.subr.mxu0 0.0
    %252 = vmatpush1.msra.mxu0 %v108
    %253 = vmatprep.subr.mxu0 0.0
    %254 = vmatpush1.msra.mxu0 %v109
    %255 = vmatprep.subr.mxu0 0.0
    %256 = vmatpush1.msra.mxu0 0.0
    %257 = vmatprep.subr.mxu0 0.0
    %258 = vmatpush1.msra.mxu0 0.0
    %259 = vmatprep.subr.mxu0 0.0
    %260 = vmatpush1.msra.mxu0 0.0
    %261 = vmatprep.subr.mxu0 0.0
    %262 = vmatpush1.msra.mxu0 0.0
    %263 = vmatprep.subr.mxu0 0.0
    %264 = vmatpush1.msra.mxu0 0.0
    %265 = vmatprep.subr.mxu0 0.0
    %266 = vmatpush1.msra.mxu0 0.0
    %267 = vmatprep.subr.mxu0 0.0
    %268 = vmatpush1.msra.mxu0 0.0
    %269 = vmatprep.subr.mxu0 0.0
    %270 = vmatpush1.msra.mxu0 0.0
    %271 = vmatprep.subr.mxu0 0.0
    %272 = vmatpush1.msra.mxu0 0.0
    %273 = vmatprep.subr.mxu0 0.0
    %274 = vmatpush1.msra.mxu0 0.0
    %275 = vmatprep.subr.mxu0 0.0
    %276 = vmatpush1.msra.mxu0 0.0
    %277 = vmatprep.subr.mxu0 0.0
    %278 = vmatpush1.msra.mxu0 0.0
    %279 = vmatprep.subr.mxu0 0.0
    %280 = vmatpush1.msra.mxu0 0.0
    %281 = vmatprep.subr.mxu0 0.0
    %282 = vmatpush1.msra.mxu0 0.0
    %283 = vmatprep.subr.mxu0 0.0
    %284 = vmatpush1.msra.mxu0 0.0
    %285 = vmatprep.subr.mxu0 0.0
    %286 = vmatpush1.msra.mxu0 0.0
    %287 = vmatprep.subr.mxu0 0.0
    %288 = vmatpush1.msra.mxu0 0.0
    %289 = vmatprep.subr.mxu0 0.0
    %290 = vmatpush1.msra.mxu0 0.0
    %291 = vmatprep.subr.mxu0 0.0
    %292 = vmatpush1.msra.mxu0 0.0
    %293 = vmatprep.subr.mxu0 0.0
    %294 = vmatpush1.msra.mxu0 0.0
    %295 = vmatprep.subr.mxu0 0.0
    %296 = vmatpush1.msra.mxu0 0.0
    %297 = vmatprep.subr.mxu0 0.0
    %298 = vmatpush1.msra.mxu0 0.0
    %299 = vmatprep.subr.mxu0 0.0
    %300 = vmatpush1.msra.mxu0 0.0
    %301 = vmatprep.subr.mxu0 0.0
    %302 = vmatpush1.msra.mxu0 0.0
    %303 = vmatprep.subr.mxu0 0.0
    %304 = vmatpush1.msra.mxu0 0.0
    %305 = vmatprep.subr.mxu0 0.0
    %306 = vmatpush1.msra.mxu0 0.0
    %307 = vmatprep.subr.mxu0 0.0
    %308 = vmatpush1.msra.mxu0 0.0
    %309 = vmatprep.subr.mxu0 0.0
    %310 = vmatpush1.msra.mxu0 0.0
    %311 = vmatprep.mubr.f32.mxu0 0.0
    %312 = vmatmul.mubr.f32.gmra.mrb[0].mxu0 %v119
    %v313 = vpop.f32.mrb[0].mxu0
    %v314 = vadd.f32 %v209, %v313
    %v315 = vpop.f32.mrb[0].mxu0
    %316 = vmatprep.mubr.f32.mxu0 0.0
    %317 = vmatmul.mubr.f32.gmra.mrb[0].mxu0 %v122
    %v318 = vpop.f32.mrb[0].mxu0
    %v319 = vadd.f32 %v214, %v318
    %v320 = vpop.f32.mrb[0].mxu0
    %321 = vmatprep.mubr.f32.mxu0 0.0
    %322 = vmatmul.mubr.f32.gmra.mrb[0].mxu0 %v125
    %v323 = vpop.f32.mrb[0].mxu0
    %v324 = vadd.f32 %v219, %v323
    %v325 = vpop.f32.mrb[0].mxu0
    %326 = vmatprep.mubr.f32.mxu0 0.0
    %327 = vmatmul.mubr.f32.gmra.mrb[0].mxu0 %v128
    %v328 = vpop.f32.mrb[0].mxu0
    %v329 = vadd.f32 %v224, %v328
    %v330 = vpop.f32.mrb[0].mxu0
    %331 = vmatprep.mubr.f32.mxu0 0.0
    %332 = vmatmul.mubr.f32.gmra.mrb[0].mxu0 %v131
    %v333 = vpop.f32.mrb[0].mxu0
    %v334 = vadd.f32 %v229, %v333
    %v335 = vpop.f32.mrb[0].mxu0
    %336 = vmatprep.mubr.f32.mxu0 0.0
    %337 = vmatmul.mubr.f32.gmra.mrb[0].mxu0 %v134
    %v338 = vpop.f32.mrb[0].mxu0
    %v339 = vadd.f32 %v234, %v338
    %v340 = vpop.f32.mrb[0].mxu0
    %341 = vmatprep.mubr.f32.mxu0 0.0
    %342 = vmatmul.mubr.f32.gmra.mrb[0].mxu0 %v137
    %v343 = vpop.f32.mrb[0].mxu0
    %v344 = vadd.f32 %v239, %v343
    %v345 = vpop.f32.mrb[0].mxu0
    %346 = vmatprep.mubr.f32.mxu0 0.0
    %347 = vmatmul.mubr.f32.gmra.mrb[0].mxu0 %v140
    %v348 = vpop.f32.mrb[0].mxu0
    %v349 = vadd.f32 %v244, %v348
    %v350 = vpop.f32.mrb[0].mxu0
    %351 = vdwg.mxu0
    %v352 = vmax.f32 %v314, %v324
    %v353 = vmax.f32 %v319, %v329
    %v354 = vmax.f32 %v334, %v344
    %v355 = vmax.f32 %v339, %v349
    %v356 = vmax.f32 %v352, %v354
    %v357 = vmax.f32 %v353, %v355
    %v358 = vmax.f32 %v356, 0.0
    %v359 = vmax.f32 %v357, 0.0
    %v360 = vld [vmem:[%s4] sm:$0x1]
    %v361 = vld [vmem:[%s3] sm:$0xff]
    %v362 = vld [vmem:[%s3 + $0x8] sm:$0xff]
    %v363 = vld [vmem:[%s3 + $0x10] sm:$0xff]
    %v364 = vld [vmem:[%s3 + $0x18] sm:$0xff]
    %v365 = vld [vmem:[%s3 + $0x20] sm:$0xff]
    %v366 = vld [vmem:[%s3 + $0x28] sm:$0xff]
    %v367 = vld [vmem:[%s3 + $0x30] sm:$0xff]
    %v368 = vld [vmem:[%s3 + $0x38] sm:$0xff]
    %vm369 = vcmask 523264
    %v371 = vsel %vm369, %v358, 0
    %373 = vmatprep.subr.mxu0 0.0
    %374 = vmatpush1.msra.mxu0 %v361
    %375 = vmatprep.subr.mxu0 0.0
    %376 = vmatpush1.msra.mxu0 %v362
    %377 = vmatprep.subr.mxu0 0.0
    %378 = vmatpush1.msra.mxu0 %v363
    %379 = vmatprep.subr.mxu0 0.0
    %380 = vmatpush1.msra.mxu0 %v364
    %381 = vmatprep.subr.mxu0 0.0
    %382 = vmatpush1.msra.mxu0 %v365
    %383 = vmatprep.subr.mxu0 0.0
    %384 = vmatpush1.msra.mxu0 %v366
    %385 = vmatprep.subr.mxu0 0.0
    %386 = vmatpush1.msra.mxu0 %v367
    %387 = vmatprep.subr.mxu0 0.0
    %388 = vmatpush1.msra.mxu0 %v368
    %389 = vmatprep.subr.mxu0 0.0
    %390 = vmatpush1.msra.mxu0 0.0
    %391 = vmatprep.subr.mxu0 0.0
    %392 = vmatpush1.msra.mxu0 0.0
    %393 = vmatprep.subr.mxu0 0.0
    %394 = vmatpush1.msra.mxu0 0.0
    %395 = vmatprep.subr.mxu0 0.0
    %396 = vmatpush1.msra.mxu0 0.0
    %397 = vmatprep.subr.mxu0 0.0
    %398 = vmatpush1.msra.mxu0 0.0
    %399 = vmatprep.subr.mxu0 0.0
    %400 = vmatpush1.msra.mxu0 0.0
    %401 = vmatprep.subr.mxu0 0.0
    %402 = vmatpush1.msra.mxu0 0.0
    %403 = vmatprep.subr.mxu0 0.0
    %404 = vmatpush1.msra.mxu0 0.0
    %405 = vmatprep.subr.mxu0 0.0
    %406 = vmatpush1.msra.mxu0 0.0
    %407 = vmatprep.subr.mxu0 0.0
    %408 = vmatpush1.msra.mxu0 0.0
    %409 = vmatprep.subr.mxu0 0.0
    %410 = vmatpush1.msra.mxu0 0.0
    %411 = vmatprep.subr.mxu0 0.0
    %412 = vmatpush1.msra.mxu0 0.0
    %413 = vmatprep.subr.mxu0 0.0
    %414 = vmatpush1.msra.mxu0 0.0
    %415 = vmatprep.subr.mxu0 0.0
    %416 = vmatpush1.msra.mxu0 0.0
    %417 = vmatprep.subr.mxu0 0.0
    %418 = vmatpush1.msra.mxu0 0.0
    %419 = vmatprep.subr.mxu0 0.0
    %420 = vmatpush1.msra.mxu0 0.0
    %421 = vmatprep.subr.mxu0 0.0
    %422 = vmatpush1.msra.mxu0 0.0
    %423 = vmatprep.subr.mxu0 0.0
    %424 = vmatpush1.msra.mxu0 0.0
    %425 = vmatprep.subr.mxu0 0.0
    %426 = vmatpush1.msra.mxu0 0.0
    %427 = vmatprep.subr.mxu0 0.0
    %428 = vmatpush1.msra.mxu0 0.0
    %429 = vmatprep.subr.mxu0 0.0
    %430 = vmatpush1.msra.mxu0 0.0
    %431 = vmatprep.subr.mxu0 0.0
    %432 = vmatpush1.msra.mxu0 0.0
    %433 = vmatprep.subr.mxu0 0.0
    %434 = vmatpush1.msra.mxu0 0.0
    %435 = vmatprep.subr.mxu0 0.0
    %436 = vmatpush1.msra.mxu0 0.0
    %437 = vmatprep.mubr.f32.mxu0 0.0
    %438 = vmatmul.mubr.f32.gmra.mrb[0].mxu0 %v371
    %v439 = vpop.f32.mrb[0].mxu0
    %v440 = vadd.f32 0.0, %v439
    %v441 = vpop.f32.mrb[0].mxu0
    %442 = vdwg.mxu0
    %v444 = vlaneseq
    %v445 = vshrl.u32 %v444, 7
    %v446 = vsub.s32 0, %v445
    %v447 = vrot.slane %v360, %v446
    %v449 = vadd.f32 %v447, %v440
    %v450 = vld [vmem:[%s3 + $0x40] sm:$0xff]
    %v451 = vld [vmem:[%s3 + $0x48] sm:$0xff]
    %v452 = vld [vmem:[%s3 + $0x50] sm:$0xff]
    %v453 = vld [vmem:[%s3 + $0x58] sm:$0xff]
    %v454 = vld [vmem:[%s3 + $0x60] sm:$0xff]
    %v455 = vld [vmem:[%s3 + $0x68] sm:$0xff]
    %v456 = vld [vmem:[%s3 + $0x70] sm:$0xff]
    %v457 = vld [vmem:[%s3 + $0x78] sm:$0xff]
    %v458 = vrot.slane %v358, 4
    %v459 = vsel %vm369, %v458, 0
    %461 = vmatprep.subr.mxu0 0.0
    %462 = vmatpush1.msra.mxu0 %v450
    %463 = vmatprep.subr.mxu0 0.0
    %464 = vmatpush1.msra.mxu0 %v451
    %465 = vmatprep.subr.mxu0 0.0
    %466 = vmatpush1.msra.mxu0 %v452
    %467 = vmatprep.subr.mxu0 0.0
    %468 = vmatpush1.msra.mxu0 %v453
    %469 = vmatprep.subr.mxu0 0.0
    %470 = vmatpush1.msra.mxu0 %v454
    %471 = vmatprep.subr.mxu0 0.0
    %472 = vmatpush1.msra.mxu0 %v455
    %473 = vmatprep.subr.mxu0 0.0
    %474 = vmatpush1.msra.mxu0 %v456
    %475 = vmatprep.subr.mxu0 0.0
    %476 = vmatpush1.msra.mxu0 %v457
    %477 = vmatprep.subr.mxu0 0.0
    %478 = vmatpush1.msra.mxu0 0.0
    %479 = vmatprep.subr.mxu0 0.0
    %480 = vmatpush1.msra.mxu0 0.0
    %481 = vmatprep.subr.mxu0 0.0
    %482 = vmatpush1.msra.mxu0 0.0
    %483 = vmatprep.subr.mxu0 0.0
    %484 = vmatpush1.msra.mxu0 0.0
    %485 = vmatprep.subr.mxu0 0.0
    %486 = vmatpush1.msra.mxu0 0.0
    %487 = vmatprep.subr.mxu0 0.0
    %488 = vmatpush1.msra.mxu0 0.0
    %489 = vmatprep.subr.mxu0 0.0
    %490 = vmatpush1.msra.mxu0 0.0
    %491 = vmatprep.subr.mxu0 0.0
    %492 = vmatpush1.msra.mxu0 0.0
    %493 = vmatprep.subr.mxu0 0.0
    %494 = vmatpush1.msra.mxu0 0.0
    %495 = vmatprep.subr.mxu0 0.0
    %496 = vmatpush1.msra.mxu0 0.0
    %497 = vmatprep.subr.mxu0 0.0
    %498 = vmatpush1.msra.mxu0 0.0
    %499 = vmatprep.subr.mxu0 0.0
    %500 = vmatpush1.msra.mxu0 0.0
    %501 = vmatprep.subr.mxu0 0.0
    %502 = vmatpush1.msra.mxu0 0.0
    %503 = vmatprep.subr.mxu0 0.0
    %504 = vmatpush1.msra.mxu0 0.0
    %505 = vmatprep.subr.mxu0 0.0
    %506 = vmatpush1.msra.mxu0 0.0
    %507 = vmatprep.subr.mxu0 0.0
    %508 = vmatpush1.msra.mxu0 0.0
    %509 = vmatprep.subr.mxu0 0.0
    %510 = vmatpush1.msra.mxu0 0.0
    %511 = vmatprep.subr.mxu0 0.0
    %512 = vmatpush1.msra.mxu0 0.0
    %513 = vmatprep.subr.mxu0 0.0
    %514 = vmatpush1.msra.mxu0 0.0
    %515 = vmatprep.subr.mxu0 0.0
    %516 = vmatpush1.msra.mxu0 0.0
    %517 = vmatprep.subr.mxu0 0.0
    %518 = vmatpush1.msra.mxu0 0.0
    %519 = vmatprep.subr.mxu0 0.0
    %520 = vmatpush1.msra.mxu0 0.0
    %521 = vmatprep.subr.mxu0 0.0
    %522 = vmatpush1.msra.mxu0 0.0
    %523 = vmatprep.subr.mxu0 0.0
    %524 = vmatpush1.msra.mxu0 0.0
    %525 = vmatprep.mubr.f32.mxu0 0.0
    %526 = vmatmul.mubr.f32.gmra.mrb[0].mxu0 %v459
    %v527 = vpop.f32.mrb[0].mxu0
    %v528 = vadd.f32 0.0, %v527
    %v529 = vpop.f32.mrb[0].mxu0
    %530 = vdwg.mxu0
    %v531 = vadd.f32 %v449, %v528
    %v532 = vld [vmem:[%s3 + $0x80] sm:$0xff]
    %v533 = vld [vmem:[%s3 + $0x88] sm:$0xff]
    %v534 = vld [vmem:[%s3 + $0x90] sm:$0xff]
    %v535 = vld [vmem:[%s3 + $0x98] sm:$0xff]
    %v536 = vld [vmem:[%s3 + $0xa0] sm:$0xff]
    %v537 = vld [vmem:[%s3 + $0xa8] sm:$0xff]
    %v538 = vld [vmem:[%s3 + $0xb0] sm:$0xff]
    %v539 = vld [vmem:[%s3 + $0xb8] sm:$0xff]
    %v541 = vsel %vm369, %v359, 0
    %543 = vmatprep.subr.mxu0 0.0
    %544 = vmatpush1.msra.mxu0 %v532
    %545 = vmatprep.subr.mxu0 0.0
    %546 = vmatpush1.msra.mxu0 %v533
    %547 = vmatprep.subr.mxu0 0.0
    %548 = vmatpush1.msra.mxu0 %v534
    %549 = vmatprep.subr.mxu0 0.0
    %550 = vmatpush1.msra.mxu0 %v535
    %551 = vmatprep.subr.mxu0 0.0
    %552 = vmatpush1.msra.mxu0 %v536
    %553 = vmatprep.subr.mxu0 0.0
    %554 = vmatpush1.msra.mxu0 %v537
    %555 = vmatprep.subr.mxu0 0.0
    %556 = vmatpush1.msra.mxu0 %v538
    %557 = vmatprep.subr.mxu0 0.0
    %558 = vmatpush1.msra.mxu0 %v539
    %559 = vmatprep.subr.mxu0 0.0
    %560 = vmatpush1.msra.mxu0 0.0
    %561 = vmatprep.subr.mxu0 0.0
    %562 = vmatpush1.msra.mxu0 0.0
    %563 = vmatprep.subr.mxu0 0.0
    %564 = vmatpush1.msra.mxu0 0.0
    %565 = vmatprep.subr.mxu0 0.0
    %566 = vmatpush1.msra.mxu0 0.0
    %567 = vmatprep.subr.mxu0 0.0
    %568 = vmatpush1.msra.mxu0 0.0
    %569 = vmatprep.subr.mxu0 0.0
    %570 = vmatpush1.msra.mxu0 0.0
    %571 = vmatprep.subr.mxu0 0.0
    %572 = vmatpush1.msra.mxu0 0.0
    %573 = vmatprep.subr.mxu0 0.0
    %574 = vmatpush1.msra.mxu0 0.0
    %575 = vmatprep.subr.mxu0 0.0
    %576 = vmatpush1.msra.mxu0 0.0
    %577 = vmatprep.subr.mxu0 0.0
    %578 = vmatpush1.msra.mxu0 0.0
    %579 = vmatprep.subr.mxu0 0.0
    %580 = vmatpush1.msra.mxu0 0.0
    %581 = vmatprep.subr.mxu0 0.0
    %582 = vmatpush1.msra.mxu0 0.0
    %583 = vmatprep.subr.mxu0 0.0
    %584 = vmatpush1.msra.mxu0 0.0
    %585 = vmatprep.subr.mxu0 0.0
    %586 = vmatpush1.msra.mxu0 0.0
    %587 = vmatprep.subr.mxu0 0.0
    %588 = vmatpush1.msra.mxu0 0.0
    %589 = vmatprep.subr.mxu0 0.0
    %590 = vmatpush1.msra.mxu0 0.0
    %591 = vmatprep.subr.mxu0 0.0
    %592 = vmatpush1.msra.mxu0 0.0
    %593 = vmatprep.subr.mxu0 0.0
    %594 = vmatpush1.msra.mxu0 0.0
    %595 = vmatprep.subr.mxu0 0.0
    %596 = vmatpush1.msra.mxu0 0.0
    %597 = vmatprep.subr.mxu0 0.0
    %598 = vmatpush1.msra.mxu0 0.0
    %599 = vmatprep.subr.mxu0 0.0
    %600 = vmatpush1.msra.mxu0 0.0
    %601 = vmatprep.subr.mxu0 0.0
    %602 = vmatpush1.msra.mxu0 0.0
    %603 = vmatprep.subr.mxu0 0.0
    %604 = vmatpush1.msra.mxu0 0.0
    %605 = vmatprep.subr.mxu0 0.0
    %606 = vmatpush1.msra.mxu0 0.0
    %607 = vmatprep.mubr.f32.mxu0 0.0
    %608 = vmatmul.mubr.f32.gmra.mrb[0].mxu0 %v541
    %v609 = vpop.f32.mrb[0].mxu0
    %v610 = vadd.f32 0.0, %v609
    %v611 = vpop.f32.mrb[0].mxu0
    %612 = vdwg.mxu0
    %v613 = vadd.f32 %v531, %v610
    %v614 = vld [vmem:[%s3 + $0xc0] sm:$0xff]
    %v615 = vld [vmem:[%s3 + $0xc8] sm:$0xff]
    %v616 = vld [vmem:[%s3 + $0xd0] sm:$0xff]
    %v617 = vld [vmem:[%s3 + $0xd8] sm:$0xff]
    %v618 = vld [vmem:[%s3 + $0xe0] sm:$0xff]
    %v619 = vld [vmem:[%s3 + $0xe8] sm:$0xff]
    %v620 = vld [vmem:[%s3 + $0xf0] sm:$0xff]
    %v621 = vld [vmem:[%s3 + $0xf8] sm:$0xff]
    %v622 = vrot.slane %v359, 4
    %v623 = vsel %vm369, %v622, 0
    %625 = vmatprep.subr.mxu0 0.0
    %626 = vmatpush1.msra.mxu0 %v614
    %627 = vmatprep.subr.mxu0 0.0
    %628 = vmatpush1.msra.mxu0 %v615
    %629 = vmatprep.subr.mxu0 0.0
    %630 = vmatpush1.msra.mxu0 %v616
    %631 = vmatprep.subr.mxu0 0.0
    %632 = vmatpush1.msra.mxu0 %v617
    %633 = vmatprep.subr.mxu0 0.0
    %634 = vmatpush1.msra.mxu0 %v618
    %635 = vmatprep.subr.mxu0 0.0
    %636 = vmatpush1.msra.mxu0 %v619
    %637 = vmatprep.subr.mxu0 0.0
    %638 = vmatpush1.msra.mxu0 %v620
    %639 = vmatprep.subr.mxu0 0.0
    %640 = vmatpush1.msra.mxu0 %v621
    %641 = vmatprep.subr.mxu0 0.0
    %642 = vmatpush1.msra.mxu0 0.0
    %643 = vmatprep.subr.mxu0 0.0
    %644 = vmatpush1.msra.mxu0 0.0
    %645 = vmatprep.subr.mxu0 0.0
    %646 = vmatpush1.msra.mxu0 0.0
    %647 = vmatprep.subr.mxu0 0.0
    %648 = vmatpush1.msra.mxu0 0.0
    %649 = vmatprep.subr.mxu0 0.0
    %650 = vmatpush1.msra.mxu0 0.0
    %651 = vmatprep.subr.mxu0 0.0
    %652 = vmatpush1.msra.mxu0 0.0
    %653 = vmatprep.subr.mxu0 0.0
    %654 = vmatpush1.msra.mxu0 0.0
    %655 = vmatprep.subr.mxu0 0.0
    %656 = vmatpush1.msra.mxu0 0.0
    %657 = vmatprep.subr.mxu0 0.0
    %658 = vmatpush1.msra.mxu0 0.0
    %659 = vmatprep.subr.mxu0 0.0
    %660 = vmatpush1.msra.mxu0 0.0
    %661 = vmatprep.subr.mxu0 0.0
    %662 = vmatpush1.msra.mxu0 0.0
    %663 = vmatprep.subr.mxu0 0.0
    %664 = vmatpush1.msra.mxu0 0.0
    %665 = vmatprep.subr.mxu0 0.0
    %666 = vmatpush1.msra.mxu0 0.0
    %667 = vmatprep.subr.mxu0 0.0
    %668 = vmatpush1.msra.mxu0 0.0
    %669 = vmatprep.subr.mxu0 0.0
    %670 = vmatpush1.msra.mxu0 0.0
    %671 = vmatprep.subr.mxu0 0.0
    %672 = vmatpush1.msra.mxu0 0.0
    %673 = vmatprep.subr.mxu0 0.0
    %674 = vmatpush1.msra.mxu0 0.0
    %675 = vmatprep.subr.mxu0 0.0
    %676 = vmatpush1.msra.mxu0 0.0
    %677 = vmatprep.subr.mxu0 0.0
    %678 = vmatpush1.msra.mxu0 0.0
    %679 = vmatprep.subr.mxu0 0.0
    %680 = vmatpush1.msra.mxu0 0.0
    %681 = vmatprep.subr.mxu0 0.0
    %682 = vmatpush1.msra.mxu0 0.0
    %683 = vmatprep.subr.mxu0 0.0
    %684 = vmatpush1.msra.mxu0 0.0
    %685 = vmatprep.subr.mxu0 0.0
    %686 = vmatpush1.msra.mxu0 0.0
    %687 = vmatprep.subr.mxu0 0.0
    %688 = vmatpush1.msra.mxu0 0.0
    %689 = vmatprep.mubr.f32.mxu0 0.0
    %690 = vmatmul.mubr.f32.gmra.mrb[0].mxu0 %v623
    %v691 = vpop.f32.mrb[0].mxu0
    %v692 = vadd.f32 0.0, %v691
    %v693 = vpop.f32.mrb[0].mxu0
    %694 = vdwg.mxu0
    %v695 = vadd.f32 %v613, %v692
    %v696 = vmax.f32 %v695, 0.0
    %v697 = vld [vmem:[%s5] sm:$0xff]
    %v698 = vld [vmem:[%s5 + $0x8] sm:$0xff]
    %v699 = vld [vmem:[%s5 + $0x10] sm:$0xff]
    %v700 = vld [vmem:[%s5 + $0x18] sm:$0xff]
    %v701 = vld [vmem:[%s6] sm:$0x1]
    %v703 = vlaneseq
    %v704 = vshrl.u32 %v703, 7
    %v705 = vsub.s32 0, %v704
    %v706 = vrot.slane %v701, %v705
    %v709 = vsel %vm117, %v696, 0
    %711 = vmatprep.subr.mxu0 0.0
    %712 = vmatpush1.msra.mxu0 %v697
    %713 = vmatprep.subr.mxu0 0.0
    %714 = vmatpush1.msra.mxu0 %v698
    %715 = vmatprep.subr.mxu0 0.0
    %716 = vmatpush1.msra.mxu0 %v699
    %717 = vmatprep.subr.mxu0 0.0
    %718 = vmatpush1.msra.mxu0 %v700
    %719 = vmatprep.subr.mxu0 0.0
    %720 = vmatpush1.msra.mxu0 0.0
    %721 = vmatprep.subr.mxu0 0.0
    %722 = vmatpush1.msra.mxu0 0.0
    %723 = vmatprep.subr.mxu0 0.0
    %724 = vmatpush1.msra.mxu0 0.0
    %725 = vmatprep.subr.mxu0 0.0
    %726 = vmatpush1.msra.mxu0 0.0
    %727 = vmatprep.subr.mxu0 0.0
    %728 = vmatpush1.msra.mxu0 0.0
    %729 = vmatprep.subr.mxu0 0.0
    %730 = vmatpush1.msra.mxu0 0.0
    %731 = vmatprep.subr.mxu0 0.0
    %732 = vmatpush1.msra.mxu0 0.0
    %733 = vmatprep.subr.mxu0 0.0
    %734 = vmatpush1.msra.mxu0 0.0
    %735 = vmatprep.subr.mxu0 0.0
    %736 = vmatpush1.msra.mxu0 0.0
    %737 = vmatprep.subr.mxu0 0.0
    %738 = vmatpush1.msra.mxu0 0.0
    %739 = vmatprep.subr.mxu0 0.0
    %740 = vmatpush1.msra.mxu0 0.0
    %741 = vmatprep.subr.mxu0 0.0
    %742 = vmatpush1.msra.mxu0 0.0
    %743 = vmatprep.subr.mxu0 0.0
    %744 = vmatpush1.msra.mxu0 0.0
    %745 = vmatprep.subr.mxu0 0.0
    %746 = vmatpush1.msra.mxu0 0.0
    %747 = vmatprep.subr.mxu0 0.0
    %748 = vmatpush1.msra.mxu0 0.0
    %749 = vmatprep.subr.mxu0 0.0
    %750 = vmatpush1.msra.mxu0 0.0
    %751 = vmatprep.subr.mxu0 0.0
    %752 = vmatpush1.msra.mxu0 0.0
    %753 = vmatprep.subr.mxu0 0.0
    %754 = vmatpush1.msra.mxu0 0.0
    %755 = vmatprep.subr.mxu0 0.0
    %756 = vmatpush1.msra.mxu0 0.0
    %757 = vmatprep.subr.mxu0 0.0
    %758 = vmatpush1.msra.mxu0 0.0
    %759 = vmatprep.subr.mxu0 0.0
    %760 = vmatpush1.msra.mxu0 0.0
    %761 = vmatprep.subr.mxu0 0.0
    %762 = vmatpush1.msra.mxu0 0.0
    %763 = vmatprep.subr.mxu0 0.0
    %764 = vmatpush1.msra.mxu0 0.0
    %765 = vmatprep.subr.mxu0 0.0
    %766 = vmatpush1.msra.mxu0 0.0
    %767 = vmatprep.subr.mxu0 0.0
    %768 = vmatpush1.msra.mxu0 0.0
    %769 = vmatprep.subr.mxu0 0.0
    %770 = vmatpush1.msra.mxu0 0.0
    %771 = vmatprep.subr.mxu0 0.0
    %772 = vmatpush1.msra.mxu0 0.0
    %773 = vmatprep.subr.mxu0 0.0
    %774 = vmatpush1.msra.mxu0 0.0
    %775 = vmatprep.mubr.f32.mxu0 0.0
    %776 = vmatmul.mubr.f32.gmra.mrb[0].mxu0 %v709
    %v777 = vpop.f32.mrb[0].mxu0
    %v778 = vadd.f32 %v706, %v777
    %v779 = vpop.f32.mrb[0].mxu0
    %780 = vdwg.mxu0
    %vm781 = vcmask 76800
    %782 = vst.msk [vmem:[%s14] sm:$0xf] %vm781, %v778
    %v783 = vld [vmem:[%s7] sm:$0xff]
    %v784 = vld [vmem:[%s7 + $0x8] sm:$0x3]
    %v785 = vld [vmem:[%s8] sm:$0xff]
    %v786 = vld [vmem:[%s8 + $0x8] sm:$0x3]
    %v788 = vrot.slane %v778, 2
    %vm789 = vcmask 80896
    %v790 = vsel %vm789, %v788, 0
    %vm792 = vcmask 1041408
    %v794 = vsel %vm792, %v786, 0
    %796 = vmatprep.subr.mxu0 0.0
    %797 = vmatpush1.msra.mxu0 %v785
    %798 = vmatprep.subr.mxu0 0.0
    %799 = vmatpush1.msra.mxu0 %v794
    %800 = vmatprep.subr.mxu0 0.0
    %801 = vmatpush1.msra.mxu0 0.0
    %802 = vmatprep.subr.mxu0 0.0
    %803 = vmatpush1.msra.mxu0 0.0
    %804 = vmatprep.subr.mxu0 0.0
    %805 = vmatpush1.msra.mxu0 0.0
    %806 = vmatprep.subr.mxu0 0.0
    %807 = vmatpush1.msra.mxu0 0.0
    %808 = vmatprep.subr.mxu0 0.0
    %809 = vmatpush1.msra.mxu0 0.0
    %810 = vmatprep.subr.mxu0 0.0
    %811 = vmatpush1.msra.mxu0 0.0
    %812 = vmatprep.subr.mxu0 0.0
    %813 = vmatpush1.msra.mxu0 0.0
    %814 = vmatprep.subr.mxu0 0.0
    %815 = vmatpush1.msra.mxu0 0.0
    %816 = vmatprep.subr.mxu0 0.0
    %817 = vmatpush1.msra.mxu0 0.0
    %818 = vmatprep.subr.mxu0 0.0
    %819 = vmatpush1.msra.mxu0 0.0
    %820 = vmatprep.subr.mxu0 0.0
    %821 = vmatpush1.msra.mxu0 0.0
    %822 = vmatprep.subr.mxu0 0.0
    %823 = vmatpush1.msra.mxu0 0.0
    %824 = vmatprep.subr.mxu0 0.0
    %825 = vmatpush1.msra.mxu0 0.0
    %826 = vmatprep.subr.mxu0 0.0
    %827 = vmatpush1.msra.mxu0 0.0
    %828 = vmatprep.subr.mxu0 0.0
    %829 = vmatpush1.msra.mxu0 0.0
    %830 = vmatprep.subr.mxu0 0.0
    %831 = vmatpush1.msra.mxu0 0.0
    %832 = vmatprep.subr.mxu0 0.0
    %833 = vmatpush1.msra.mxu0 0.0
    %834 = vmatprep.subr.mxu0 0.0
    %835 = vmatpush1.msra.mxu0 0.0
    %836 = vmatprep.subr.mxu0 0.0
    %837 = vmatpush1.msra.mxu0 0.0
    %838 = vmatprep.subr.mxu0 0.0
    %839 = vmatpush1.msra.mxu0 0.0
    %840 = vmatprep.subr.mxu0 0.0
    %841 = vmatpush1.msra.mxu0 0.0
    %842 = vmatprep.subr.mxu0 0.0
    %843 = vmatpush1.msra.mxu0 0.0
    %844 = vmatprep.subr.mxu0 0.0
    %845 = vmatpush1.msra.mxu0 0.0
    %846 = vmatprep.subr.mxu0 0.0
    %847 = vmatpush1.msra.mxu0 0.0
    %848 = vmatprep.subr.mxu0 0.0
    %849 = vmatpush1.msra.mxu0 0.0
    %850 = vmatprep.subr.mxu0 0.0
    %851 = vmatpush1.msra.mxu0 0.0
    %852 = vmatprep.subr.mxu0 0.0
    %853 = vmatpush1.msra.mxu0 0.0
    %854 = vmatprep.subr.mxu0 0.0
    %855 = vmatpush1.msra.mxu0 0.0
    %856 = vmatprep.subr.mxu0 0.0
    %857 = vmatpush1.msra.mxu0 0.0
    %858 = vmatprep.subr.mxu0 0.0
    %859 = vmatpush1.msra.mxu0 0.0
    %860 = vmatprep.mubr.f32.mxu0 0.0
    %861 = vmatmul.mubr.f32.gmra.mrb[0].mxu0 %v790
    %v862 = vpop.f32.mrb[0].mxu0
    %v863 = vadd.f32 0.0, %v862
    %v864 = vpop.f32.mrb[0].mxu0
    %865 = vdwg.mxu0
    %v866 = vsel %vm789, %v778, 0
    %v869 = vsel %vm792, %v784, 0
    %871 = vmatprep.subr.mxu0 0.0
    %872 = vmatpush1.msra.mxu0 %v783
    %873 = vmatprep.subr.mxu0 0.0
    %874 = vmatpush1.msra.mxu0 %v869
    %875 = vmatprep.subr.mxu0 0.0
    %876 = vmatpush1.msra.mxu0 0.0
    %877 = vmatprep.subr.mxu0 0.0
    %878 = vmatpush1.msra.mxu0 0.0
    %879 = vmatprep.subr.mxu0 0.0
    %880 = vmatpush1.msra.mxu0 0.0
    %881 = vmatprep.subr.mxu0 0.0
    %882 = vmatpush1.msra.mxu0 0.0
    %883 = vmatprep.subr.mxu0 0.0
    %884 = vmatpush1.msra.mxu0 0.0
    %885 = vmatprep.subr.mxu0 0.0
    %886 = vmatpush1.msra.mxu0 0.0
    %887 = vmatprep.subr.mxu0 0.0
    %888 = vmatpush1.msra.mxu0 0.0
    %889 = vmatprep.subr.mxu0 0.0
    %890 = vmatpush1.msra.mxu0 0.0
    %891 = vmatprep.subr.mxu0 0.0
    %892 = vmatpush1.msra.mxu0 0.0
    %893 = vmatprep.subr.mxu0 0.0
    %894 = vmatpush1.msra.mxu0 0.0
    %895 = vmatprep.subr.mxu0 0.0
    %896 = vmatpush1.msra.mxu0 0.0
    %897 = vmatprep.subr.mxu0 0.0
    %898 = vmatpush1.msra.mxu0 0.0
    %899 = vmatprep.subr.mxu0 0.0
    %900 = vmatpush1.msra.mxu0 0.0
    %901 = vmatprep.subr.mxu0 0.0
    %902 = vmatpush1.msra.mxu0 0.0
    %903 = vmatprep.subr.mxu0 0.0
    %904 = vmatpush1.msra.mxu0 0.0
    %905 = vmatprep.subr.mxu0 0.0
    %906 = vmatpush1.msra.mxu0 0.0
    %907 = vmatprep.subr.mxu0 0.0
    %908 = vmatpush1.msra.mxu0 0.0
    %909 = vmatprep.subr.mxu0 0.0
    %910 = vmatpush1.msra.mxu0 0.0
    %911 = vmatprep.subr.mxu0 0.0
    %912 = vmatpush1.msra.mxu0 0.0
    %913 = vmatprep.subr.mxu0 0.0
    %914 = vmatpush1.msra.mxu0 0.0
    %915 = vmatprep.subr.mxu0 0.0
    %916 = vmatpush1.msra.mxu0 0.0
    %917 = vmatprep.subr.mxu0 0.0
    %918 = vmatpush1.msra.mxu0 0.0
    %919 = vmatprep.subr.mxu0 0.0
    %920 = vmatpush1.msra.mxu0 0.0
    %921 = vmatprep.subr.mxu0 0.0
    %922 = vmatpush1.msra.mxu0 0.0
    %923 = vmatprep.subr.mxu0 0.0
    %924 = vmatpush1.msra.mxu0 0.0
    %925 = vmatprep.subr.mxu0 0.0
    %926 = vmatpush1.msra.mxu0 0.0
    %927 = vmatprep.subr.mxu0 0.0
    %928 = vmatpush1.msra.mxu0 0.0
    %929 = vmatprep.subr.mxu0 0.0
    %930 = vmatpush1.msra.mxu0 0.0
    %931 = vmatprep.subr.mxu0 0.0
    %932 = vmatpush1.msra.mxu0 0.0
    %933 = vmatprep.subr.mxu0 0.0
    %934 = vmatpush1.msra.mxu0 0.0
    %935 = vmatprep.mubr.f32.mxu0 0.0
    %936 = vmatmul.mubr.f32.gmra.mrb[0].mxu0 %v866
    %v937 = vpop.f32.mrb[0].mxu0
    %v938 = vadd.f32 %v863, %v937
    %v939 = vpop.f32.mrb[0].mxu0
    %940 = vdwg.mxu0
    %v941 = vld [vmem:[%s9] sm:$0x1]
    %v943 = vlaneseq
    %v944 = vshrl.u32 %v943, 7
    %v945 = vsub.s32 0, %v944
    %v946 = vrot.slane %v941, %v945
    %v948 = vadd.f32 %v938, %v946
    %v949 = vmax.f32 %v948, 0.0
    %v950 = vld [vmem:[%s10] sm:$0xff]
    %v951 = vld [vmem:[%s10 + $0x8] sm:$0xff]
    %v952 = vld [vmem:[%s10 + $0x10] sm:$0xff]
    %v953 = vld [vmem:[%s10 + $0x18] sm:$0xff]
    %v954 = vld [vmem:[%s10 + $0x20] sm:$0xff]
    %v955 = vld [vmem:[%s10 + $0x28] sm:$0xff]
    %v956 = vld [vmem:[%s10 + $0x30] sm:$0xff]
    %v957 = vld [vmem:[%s10 + $0x38] sm:$0xf]
    %v958 = vld [vmem:[%s11] sm:$0x1]
    %v960 = vlaneseq
    %v961 = vshrl.u32 %v960, 7
    %v962 = vsub.s32 0, %v961
    %v963 = vrot.slane %v958, %v962
    %vm965 = vcmask 490496
    %v967 = vsel %vm965, %v949, 0
    %vm969 = vcmask 1043456
    %v971 = vsel %vm969, %v957, 0
    %973 = vmatprep.subr.mxu0 0.0
    %974 = vmatpush1.msra.mxu0 %v950
    %975 = vmatprep.subr.mxu0 0.0
    %976 = vmatpush1.msra.mxu0 %v951
    %977 = vmatprep.subr.mxu0 0.0
    %978 = vmatpush1.msra.mxu0 %v952
    %979 = vmatprep.subr.mxu0 0.0
    %980 = vmatpush1.msra.mxu0 %v953
    %981 = vmatprep.subr.mxu0 0.0
    %982 = vmatpush1.msra.mxu0 %v954
    %983 = vmatprep.subr.mxu0 0.0
    %984 = vmatpush1.msra.mxu0 %v955
    %985 = vmatprep.subr.mxu0 0.0
    %986 = vmatpush1.msra.mxu0 %v956
    %987 = vmatprep.subr.mxu0 0.0
    %988 = vmatpush1.msra.mxu0 %v971
    %989 = vmatprep.subr.mxu0 0.0
    %990 = vmatpush1.msra.mxu0 0.0
    %991 = vmatprep.subr.mxu0 0.0
    %992 = vmatpush1.msra.mxu0 0.0
    %993 = vmatprep.subr.mxu0 0.0
    %994 = vmatpush1.msra.mxu0 0.0
    %995 = vmatprep.subr.mxu0 0.0
    %996 = vmatpush1.msra.mxu0 0.0
    %997 = vmatprep.subr.mxu0 0.0
    %998 = vmatpush1.msra.mxu0 0.0
    %999 = vmatprep.subr.mxu0 0.0
    %1000 = vmatpush1.msra.mxu0 0.0
    %1001 = vmatprep.subr.mxu0 0.0
    %1002 = vmatpush1.msra.mxu0 0.0
    %1003 = vmatprep.subr.mxu0 0.0
    %1004 = vmatpush1.msra.mxu0 0.0
    %1005 = vmatprep.subr.mxu0 0.0
    %1006 = vmatpush1.msra.mxu0 0.0
    %1007 = vmatprep.subr.mxu0 0.0
    %1008 = vmatpush1.msra.mxu0 0.0
    %1009 = vmatprep.subr.mxu0 0.0
    %1010 = vmatpush1.msra.mxu0 0.0
    %1011 = vmatprep.subr.mxu0 0.0
    %1012 = vmatpush1.msra.mxu0 0.0
    %1013 = vmatprep.subr.mxu0 0.0
    %1014 = vmatpush1.msra.mxu0 0.0
    %1015 = vmatprep.subr.mxu0 0.0
    %1016 = vmatpush1.msra.mxu0 0.0
    %1017 = vmatprep.subr.mxu0 0.0
    %1018 = vmatpush1.msra.mxu0 0.0
    %1019 = vmatprep.subr.mxu0 0.0
    %1020 = vmatpush1.msra.mxu0 0.0
    %1021 = vmatprep.subr.mxu0 0.0
    %1022 = vmatpush1.msra.mxu0 0.0
    %1023 = vmatprep.subr.mxu0 0.0
    %1024 = vmatpush1.msra.mxu0 0.0
    %1025 = vmatprep.subr.mxu0 0.0
    %1026 = vmatpush1.msra.mxu0 0.0
    %1027 = vmatprep.subr.mxu0 0.0
    %1028 = vmatpush1.msra.mxu0 0.0
    %1029 = vmatprep.subr.mxu0 0.0
    %1030 = vmatpush1.msra.mxu0 0.0
    %1031 = vmatprep.subr.mxu0 0.0
    %1032 = vmatpush1.msra.mxu0 0.0
    %1033 = vmatprep.subr.mxu0 0.0
    %1034 = vmatpush1.msra.mxu0 0.0
    %1035 = vmatprep.subr.mxu0 0.0
    %1036 = vmatpush1.msra.mxu0 0.0
    %1037 = vmatprep.mubr.f32.mxu0 0.0
    %1038 = vmatmul.mubr.f32.gmra.mrb[0].mxu0 %v967
    %v1039 = vpop.f32.mrb[0].mxu0
    %v1040 = vadd.f32 %v963, %v1039
    %v1041 = vpop.f32.mrb[0].mxu0
    %1042 = vdwg.mxu0
    %v1043 = vmax.f32 %v1040, 0.0
    %v1044 = vld [vmem:[%s12] sm:$0xff]
    %v1045 = vld [vmem:[%s12 + $0x8] sm:$0xff]
    %v1046 = vld [vmem:[%s12 + $0x10] sm:$0xff]
    %v1047 = vld [vmem:[%s12 + $0x18] sm:$0xff]
    %v1048 = vld [vmem:[%s12 + $0x20] sm:$0xff]
    %v1049 = vld [vmem:[%s12 + $0x28] sm:$0xff]
    %v1050 = vld [vmem:[%s12 + $0x30] sm:$0xff]
    %v1051 = vld [vmem:[%s12 + $0x38] sm:$0xff]
    %v1052 = vld [vmem:[%s12 + $0x40] sm:$0xff]
    %v1053 = vld [vmem:[%s12 + $0x48] sm:$0xff]
    %v1054 = vld [vmem:[%s12 + $0x50] sm:$0xff]
    %v1055 = vld [vmem:[%s12 + $0x58] sm:$0x3]
    %v1056 = vld [vmem:[%s13] sm:$0x1]
    %v1058 = vlaneseq
    %v1059 = vshrl.u32 %v1058, 7
    %v1060 = vsub.s32 0, %v1059
    %v1061 = vrot.slane %v1056, %v1060
    %vm1063 = vcmask 736256
    %v1065 = vsel %vm1063, %v1043, 0
    %v1068 = vsel %vm792, %v1055, 0
    %1070 = vmatprep.subr.mxu0 0.0
    %1071 = vmatpush1.msra.mxu0 %v1044
    %1072 = vmatprep.subr.mxu0 0.0
    %1073 = vmatpush1.msra.mxu0 %v1045
    %1074 = vmatprep.subr.mxu0 0.0
    %1075 = vmatpush1.msra.mxu0 %v1046
    %1076 = vmatprep.subr.mxu0 0.0
    %1077 = vmatpush1.msra.mxu0 %v1047
    %1078 = vmatprep.subr.mxu0 0.0
    %1079 = vmatpush1.msra.mxu0 %v1048
    %1080 = vmatprep.subr.mxu0 0.0
    %1081 = vmatpush1.msra.mxu0 %v1049
    %1082 = vmatprep.subr.mxu0 0.0
    %1083 = vmatpush1.msra.mxu0 %v1050
    %1084 = vmatprep.subr.mxu0 0.0
    %1085 = vmatpush1.msra.mxu0 %v1051
    %1086 = vmatprep.subr.mxu0 0.0
    %1087 = vmatpush1.msra.mxu0 %v1052
    %1088 = vmatprep.subr.mxu0 0.0
    %1089 = vmatpush1.msra.mxu0 %v1053
    %1090 = vmatprep.subr.mxu0 0.0
    %1091 = vmatpush1.msra.mxu0 %v1054
    %1092 = vmatprep.subr.mxu0 0.0
    %1093 = vmatpush1.msra.mxu0 %v1068
    %1094 = vmatprep.subr.mxu0 0.0
    %1095 = vmatpush1.msra.mxu0 0.0
    %1096 = vmatprep.subr.mxu0 0.0
    %1097 = vmatpush1.msra.mxu0 0.0
    %1098 = vmatprep.subr.mxu0 0.0
    %1099 = vmatpush1.msra.mxu0 0.0
    %1100 = vmatprep.subr.mxu0 0.0
    %1101 = vmatpush1.msra.mxu0 0.0
    %1102 = vmatprep.subr.mxu0 0.0
    %1103 = vmatpush1.msra.mxu0 0.0
    %1104 = vmatprep.subr.mxu0 0.0
    %1105 = vmatpush1.msra.mxu0 0.0
    %1106 = vmatprep.subr.mxu0 0.0
    %1107 = vmatpush1.msra.mxu0 0.0
    %1108 = vmatprep.subr.mxu0 0.0
    %1109 = vmatpush1.msra.mxu0 0.0
    %1110 = vmatprep.subr.mxu0 0.0
    %1111 = vmatpush1.msra.mxu0 0.0
    %1112 = vmatprep.subr.mxu0 0.0
    %1113 = vmatpush1.msra.mxu0 0.0
    %1114 = vmatprep.subr.mxu0 0.0
    %1115 = vmatpush1.msra.mxu0 0.0
    %1116 = vmatprep.subr.mxu0 0.0
    %1117 = vmatpush1.msra.mxu0 0.0
    %1118 = vmatprep.subr.mxu0 0.0
    %1119 = vmatpush1.msra.mxu0 0.0
    %1120 = vmatprep.subr.mxu0 0.0
    %1121 = vmatpush1.msra.mxu0 0.0
    %1122 = vmatprep.subr.mxu0 0.0
    %1123 = vmatpush1.msra.mxu0 0.0
    %1124 = vmatprep.subr.mxu0 0.0
    %1125 = vmatpush1.msra.mxu0 0.0
    %1126 = vmatprep.subr.mxu0 0.0
    %1127 = vmatpush1.msra.mxu0 0.0
    %1128 = vmatprep.subr.mxu0 0.0
    %1129 = vmatpush1.msra.mxu0 0.0
    %1130 = vmatprep.subr.mxu0 0.0
    %1131 = vmatpush1.msra.mxu0 0.0
    %1132 = vmatprep.subr.mxu0 0.0
    %1133 = vmatpush1.msra.mxu0 0.0
    %1134 = vmatprep.mubr.f32.mxu0 0.0
    %1135 = vmatmul.mubr.f32.gmra.mrb[0].mxu0 %v1065
    %v1136 = vpop.f32.mrb[0].mxu0
    %v1137 = vadd.f32 %v1061, %v1136
    %v1138 = vpop.f32.mrb[0].mxu0
    %1139 = vdwg.mxu0
    %vm1140 = vcmask 9216
    %1141 = vst.msk [vmem:[#allocation2] sm:$0x3] %vm1140, %v1137
    // Predicated region
    $region58: #{compnet2_forward.3} parent=1 // pred_check
      _
    $region59: #{compnet2_forward.3} parent=1 // pred_check_branch
      %1143 = sbr.rel (0) target = $region61
    $region60: #{compnet2_forward.3} parent=1 // pred_region
      _
    $region61: #{compnet2_forward.3} parent=1 // pred_fallthru
      _
    // Predicated region
    $region62: #{compnet2_forward.3} parent=1 // pred_check
      _
    $region63: #{compnet2_forward.3} parent=1 // pred_check_branch
      %1145 = sbr.rel (0) target = $region65
    $region64: #{compnet2_forward.3} parent=1 // pred_region
      %s1147 = ssub.s32 32, 32
      %1148 = vsyncadd [#allocation3], %s1147
      %s1150 = sshll.u32 [#allocation2], 4
      %s1151 = int_to_ptr.vmem [resolvable:$true] %s1150
      %1153 = dma.vmem_to_hbm [thread:$0]  %s1151, 32, %s15, [#allocation3]
    $region65: #{compnet2_forward.3} parent=1 // pred_fallthru
      _
    // Predicated region
    $region66: #{compnet2_forward.3} parent=1 // pred_check
      _
    $region67: #{compnet2_forward.3} parent=1 // pred_check_branch
      %1155 = sbr.rel (0) target = $region69
    $region68: #{compnet2_forward.3} parent=1 // pred_region
      _
    $region69: #{compnet2_forward.3} parent=1 // pred_fallthru
      _
    // Predicated region
    $region70: #{compnet2_forward.3} parent=1 // pred_check
      _
    $region71: #{compnet2_forward.3} parent=1 // pred_check_branch
      %1157 = sbr.rel (0) target = $region73
    $region72: #{compnet2_forward.3} parent=1 // pred_region
      %1158 = dma.done [#allocation3], 32
    $region73: #{compnet2_forward.3} parent=1 // pred_fallthru
      _
    %1159 = vsyncpa [#allocation3], 1

</llo_original>
